<compile_context>
chip_gen: v5e
topology: v5e:2x2
jax: 0.10.0
libtpu: 0.0.40
codegen_flags: <defaults>
</compile_context>

<pallas_src>
from functools import partial

import jax
import jax.numpy as jnp
from jax.experimental import pallas as pl
from jax.experimental.pallas import tpu as pltpu


# ----------------------------- Pallas kernel ------------------------------- #

def glycan_compgcn_kernel(x0_ref, adj_ref, rel_ref, wmsg_ref, wself_ref, b_ref,
                          assign_ref, node_out_ref, graph_out_ref):
    # x0_ref:     (N_pad, D_pad)       bf16   embedded node features
    # adj_ref:    (R, N_pad, N_pad)    bf16   A[r, dst, src] (integer counts)
    # rel_ref:    (L, R, D_pad)        f32    per-layer relation embeddings
    # wmsg_ref:   (L, D_pad, D_pad)    bf16   message-path weights
    # wself_ref:  (L, D_pad, D_pad)    bf16   diag(loop) @ W_self (loop folded in)
    # b_ref:      (L, 1, D_pad)        f32    b_msg + b_self
    # assign_ref: (B_pad, N_pad)       bf16   graph membership (sum readout)
    num_layers = wmsg_ref.shape[0]
    num_rel = adj_ref.shape[0]

    x = x0_ref[...]                              # (N_pad, D_pad) bf16
    h = x.astype(jnp.float32)

    for l in range(num_layers):                  # static unroll over layers
        rel_l = rel_ref[l]                       # (R, D_pad) f32
        # A_r @ (x * rel_r) == (A_r @ x) * rel_r  (rel_r broadcasts over nodes):
        # R MXU matmuls with f32 accumulation + f32 post-scale, no (R*N, D) copy.
        agg = (jnp.dot(adj_ref[0], x, preferred_element_type=jnp.float32)
               * rel_l[0:1, :])
        for r in range(1, num_rel):
            agg = agg + (jnp.dot(adj_ref[r], x, preferred_element_type=jnp.float32)
                         * rel_l[r:r + 1, :])

        # Output transform: two K=D_pad dots (no lane-axis concat); the
        # self-loop embedding is already folded into wself at pack time.
        h = (jnp.dot(agg.astype(x.dtype), wmsg_ref[l],
                     preferred_element_type=jnp.float32)
             + jnp.dot(x, wself_ref[l], preferred_element_type=jnp.float32)
             + b_ref[l])
        h = jnp.maximum(h, 0.0)                  # relu
        x = h.astype(x0_ref.dtype)

    node_out_ref[...] = h                        # final layer, f32
    graph_out_ref[...] = jnp.dot(assign_ref[...], x,       # sum readout (bf16 in,
                                 preferred_element_type=jnp.float32)  # f32 acc)


# --------------------------- One-time packing ------------------------------- #

def _round_up(x, m):
    return (x + m - 1) // m * m


def _pad2(a, rows, cols):
    return jnp.zeros((rows, cols), a.dtype).at[:a.shape[0], :a.shape[1]].set(a)


def pack_params(params):
    """One-time weight packing (pad / stack / fold loop into W_self / bf16 cast),
    hoisted out of the per-call forward path."""
    layers = params["layers"]
    num_rel = layers[0]["rel"].shape[0]
    dims = [params["emb_init"].shape[1]] + [l["w_msg"].shape[1] for l in layers]
    # TODO(synk): make the pad granule generation/size-aware (multiples of 256
    # on v6e/v7x once hidden dims exceed 128; 128 on v5e). 128 is right here.
    d_pad = _round_up(max(dims + [128]), 128)

    emb = _pad2(params["emb_init"], params["emb_init"].shape[0], d_pad)
    rel = jnp.stack([_pad2(l["rel"], num_rel, d_pad) for l in layers])
    w_msg = jnp.stack([_pad2(l["w_msg"], d_pad, d_pad) for l in layers])
    # Fold self-loop embedding: (x ⊙ loop) @ W_self == x @ (loop.T * W_self).
    w_self = jnp.stack([_pad2(l["loop"].T * l["w_self"], d_pad, d_pad)
                        for l in layers])
    b = jnp.stack([_pad2(l["b_msg"] + l["b_self"], 1, d_pad) for l in layers])

    return {"emb": emb.astype(jnp.bfloat16),       # (U, D_pad)
            "rel": rel.astype(jnp.float32),        # (L, R, D_pad) f32 post-scale
            "w_msg": w_msg.astype(jnp.bfloat16),   # (L, D_pad, D_pad)
            "w_self": w_self.astype(jnp.bfloat16), # (L, D_pad, D_pad)
            "b": b.astype(jnp.float32)}            # (L, 1, D_pad)


def pack_graph(adj, assign):
    """One-time per-graph-batch packing of the dense adjacency and readout
    assignment (padding + bf16 casts), hoisted out of the jitted forward."""
    num_rel, n, _ = adj.shape
    num_graph = assign.shape[0]
    n_pad = _round_up(max(n, 128), 128)
    b_pad = _round_up(max(num_graph, 8), 8)
    # bf16 holds integer edge multiplicities exactly only up to 256.
    assert float(jnp.max(adj)) <= 256.0, "edge multiplicity too large for bf16 adjacency"
    adj_p = jnp.zeros((num_rel, n_pad, n_pad), jnp.bfloat16
                      ).at[:, :n, :n].set(adj.astype(jnp.bfloat16))
    assign_p = _pad2(assign, b_pad, n_pad).astype(jnp.bfloat16)
    return adj_p, assign_p


# ------------------------------ Jitted forward ------------------------------ #

@partial(jax.jit, static_argnames=("num_graph", "d_out"))
def glycan_compgcn_forward(packed, unit_type, adj_p, assign_p, *, num_graph, d_out):
    n = unit_type.shape[0]
    num_rel, n_pad, _ = adj_p.shape
    d_pad = packed["emb"].shape[1]
    b_pad = assign_p.shape[0]
    num_layers = packed["w_msg"].shape[0]

    # Per-call work: embedding gather (+ trivial zero row-pad) only.
    x0 = jnp.zeros((n_pad, d_pad), jnp.bfloat16).at[:n, :].set(
        jnp.take(packed["emb"], unit_type, axis=0))

    # Static VMEM budget for the fused, gridless, whole-graph-resident kernel.
    vmem_bytes = (
        num_rel * n_pad * n_pad * 2                # adjacency (bf16)
        + 3 * n_pad * d_pad * 2                    # x0 + bf16 activation copies
        + 2 * num_layers * d_pad * d_pad * 2       # w_msg + w_self (bf16)
        + num_layers * (num_rel + 1) * d_pad * 4   # rel + bias (f32)
        + b_pad * n_pad * 2                        # assign (bf16)
        + (n_pad + b_pad) * d_pad * 4              # outputs (f32)
        + 4 * n_pad * d_pad * 4                    # f32 intermediates (agg/h)
    )
    # Cap at v7x's 64 MiB physical VMEM; v5e/v6e (128 MiB) could go higher.
    # TODO(synk): beyond this budget switch to the tiled per-layer / sparse path.
    vmem_limit = min(max(2 * vmem_bytes, 32 * 1024 * 1024), 64 * 1024 * 1024)

    node_out, graph_out = pl.pallas_call(
        glycan_compgcn_kernel,
        out_shape=(jax.ShapeDtypeStruct((n_pad, d_pad), jnp.float32),
                   jax.ShapeDtypeStruct((b_pad, d_pad), jnp.float32)),
        in_specs=[pl.BlockSpec(memory_space=pltpu.MemorySpace.VMEM)] * 7,
        out_specs=(pl.BlockSpec(memory_space=pltpu.MemorySpace.VMEM),
                   pl.BlockSpec(memory_space=pltpu.MemorySpace.VMEM)),
        compiler_params=pltpu.CompilerParams(vmem_limit_bytes=vmem_limit),
    )(x0, adj_p, packed["rel"], packed["w_msg"], packed["w_self"], packed["b"],
      assign_p)

    return {"graph_feature": graph_out[:num_graph, :d_out],
            "node_feature": node_out[:n, :d_out]}


# ----------------------------- Pure-JAX reference --------------------------- #

def reference_forward(params, unit_type, adj, assign):
    x = params["emb_init"][unit_type]
    for layer in params["layers"]:
        msgs = x[None, :, :] * layer["rel"][:, None, :]          # (R, N, D)
        agg = jnp.einsum("rnm,rmd->nd", adj, msgs)
        h = agg @ layer["w_msg"] + layer["b_msg"]
        h = h + (x * layer["loop"]) @ layer["w_self"] + layer["b_self"]
        x = jax.nn.relu(h)
    node = x
    graph = assign @ node
    return graph, node


# ----------------------------- Parameter setup ------------------------------ #

def init_params(key, input_dim, hidden_dims, num_relation, num_unit):
    n_layers = len(hidden_dims)
    keys = jax.random.split(key, 1 + 4 * n_layers)
    params = {"emb_init": jax.random.normal(keys[0], (num_unit, input_dim),
                                            jnp.float32) * 0.1}
    dims = [input_dim] + list(hidden_dims)
    layers = []
    for i in range(n_layers):
        din, dout = dims[i], dims[i + 1]
        k = keys[1 + 4 * i: 1 + 4 * (i + 1)]
        layers.append({
            "rel":    jax.random.normal(k[0], (num_relation, din), jnp.float32) * 0.1,
            "loop":   jax.random.normal(k[1], (1, din), jnp.float32) * 0.1,
            "w_msg":  jax.random.normal(k[2], (din, dout), jnp.float32) * (din ** -0.5),
            "b_msg":  jnp.zeros((1, dout), jnp.float32),
            "w_self": jax.random.normal(k[3], (din, dout), jnp.float32) * (din ** -0.5),
            "b_self": jnp.zeros((1, dout), jnp.float32),
        })
    params["layers"] = layers
    return params


# ---------------------------------- Main ------------------------------------ #

if __name__ == "__main__":
    key = jax.random.PRNGKey(0)
    k_param, k_unit, k_edge = jax.random.split(key, 3)

    # Small synthetic glycan batch: 2 graphs, 8 nodes each (16 nodes total).
    num_nodes = 16
    num_graphs = 2
    input_dim = 32
    hidden_dims = [32, 32]
    num_relation = 3
    num_unit = 8

    params = init_params(k_param, input_dim, hidden_dims, num_relation, num_unit)

    # graph.unit_type
    unit_type = jax.random.randint(k_unit, (num_nodes,), 0, num_unit, jnp.int32)

    # Dense per-relation adjacency: random directed edges within each graph.
    ke1, ke2, ke3 = jax.random.split(k_edge, 3)
    src = jax.random.randint(ke1, (24,), 0, 8, jnp.int32)
    dst = jax.random.randint(ke2, (24,), 0, 8, jnp.int32)
    rel = jax.random.randint(ke3, (24,), 0, num_relation, jnp.int32)
    graph_of_edge = jnp.concatenate(
        [jnp.zeros((12,), jnp.int32), jnp.ones((12,), jnp.int32)])
    src = src + 8 * graph_of_edge
    dst = dst + 8 * graph_of_edge
    adj = jnp.zeros((num_relation, num_nodes, num_nodes), jnp.float32)
    adj = adj.at[rel, dst, src].add(1.0)

    # node -> graph assignment (one-hot, used for sum readout)
    node2graph = jnp.concatenate(
        [jnp.zeros((8,), jnp.int32), jnp.ones((8,), jnp.int32)])
    assign = jnp.asarray(
        node2graph[None, :] == jnp.arange(num_graphs)[:, None], jnp.float32)

    # One-time packing (hoisted out of the per-call path).
    packed = pack_params(params)
    adj_p, assign_p = pack_graph(adj, assign)

    out = glycan_compgcn_forward(packed, unit_type, adj_p, assign_p,
                                 num_graph=num_graphs, d_out=hidden_dims[-1])
    jax.block_until_ready(out)

    assert out["node_feature"].shape == (num_nodes, hidden_dims[-1])
    assert out["graph_feature"].shape == (num_graphs, hidden_dims[-1])

    # Correctness check against an f32 pure-JAX reference (bf16-level tolerance).
    ref_graph, ref_node = reference_forward(params, unit_type, adj, assign)
    assert jnp.allclose(out["node_feature"], ref_node, rtol=5e-2, atol=5e-2)
    assert jnp.allclose(out["graph_feature"], ref_graph, rtol=5e-2, atol=5e-2)

    print("KERNEL_OK")
</pallas_src>

<mosaic_0001>
module attributes {stable_mosaic.version = 11 : i64} {
  func.func @glycan_compgcn_kernel(%arg0: memref<128x128xbf16, #tpu.memory_space<vmem>>, %arg1: memref<3x128x128xbf16, #tpu.memory_space<vmem>>, %arg2: memref<2x3x128xf32, #tpu.memory_space<vmem>>, %arg3: memref<2x128x128xbf16, #tpu.memory_space<vmem>>, %arg4: memref<2x128x128xbf16, #tpu.memory_space<vmem>>, %arg5: memref<2x1x128xf32, #tpu.memory_space<vmem>>, %arg6: memref<8x128xbf16, #tpu.memory_space<vmem>>, %arg7: memref<128x128xf32, #tpu.memory_space<vmem>>, %arg8: memref<8x128xf32, #tpu.memory_space<vmem>>) attributes {dimension_semantics = [], scalar_prefetch = 0 : i64, scratch_operands = 0 : i64, tpu.core_type = #tpu.core_type<tc>} {
    %c0 = arith.constant 0 : index
    %c0_0 = arith.constant 0 : index
    %0 = vector.load %arg0[%c0, %c0_0] : memref<128x128xbf16, #tpu.memory_space<vmem>>, vector<128x128xbf16>
    %c0_1 = arith.constant 0 : index
    %c0_2 = arith.constant 0 : index
    %c0_3 = arith.constant 0 : index
    %1 = vector.load %arg2[%c0_1, %c0_2, %c0_3] : memref<2x3x128xf32, #tpu.memory_space<vmem>>, vector<1x3x128xf32>
    %2 = vector.shape_cast %1 : vector<1x3x128xf32> to vector<3x128xf32>
    %c0_4 = arith.constant 0 : index
    %c0_5 = arith.constant 0 : index
    %c0_6 = arith.constant 0 : index
    %3 = vector.load %arg1[%c0_4, %c0_5, %c0_6] : memref<3x128x128xbf16, #tpu.memory_space<vmem>>, vector<1x128x128xbf16>
    %4 = vector.shape_cast %3 : vector<1x128x128xbf16> to vector<128x128xbf16>
    %cst = arith.constant dense<0.000000e+00> : vector<128x128xf32>
    %5 = tpu.matmul %4, %0, %cst {dimension_numbers = #tpu.dot_dimension_numbers<[1], [0], [0], [1], [0, 0, 1, 1], [], []>} : vector<128x128xbf16>, vector<128x128xbf16>, vector<128x128xf32> -> vector<128x128xf32>
    %6 = vector.extract_strided_slice %2 {offsets = [0, 0], sizes = [1, 128], strides = [1, 1]} : vector<3x128xf32> to vector<1x128xf32>
    %7 = vector.broadcast %6 : vector<1x128xf32> to vector<128x128xf32>
    %8 = arith.mulf %5, %7 : vector<128x128xf32>
    %c1 = arith.constant 1 : index
    %c0_7 = arith.constant 0 : index
    %c0_8 = arith.constant 0 : index
    %9 = vector.load %arg1[%c1, %c0_7, %c0_8] : memref<3x128x128xbf16, #tpu.memory_space<vmem>>, vector<1x128x128xbf16>
    %10 = vector.shape_cast %9 : vector<1x128x128xbf16> to vector<128x128xbf16>
    %cst_9 = arith.constant dense<0.000000e+00> : vector<128x128xf32>
    %11 = tpu.matmul %10, %0, %cst_9 {dimension_numbers = #tpu.dot_dimension_numbers<[1], [0], [0], [1], [0, 0, 1, 1], [], []>} : vector<128x128xbf16>, vector<128x128xbf16>, vector<128x128xf32> -> vector<128x128xf32>
    %12 = vector.extract_strided_slice %2 {offsets = [1, 0], sizes = [1, 128], strides = [1, 1]} : vector<3x128xf32> to vector<1x128xf32>
    %13 = vector.broadcast %12 : vector<1x128xf32> to vector<128x128xf32>
    %14 = arith.mulf %11, %13 : vector<128x128xf32>
    %15 = arith.addf %8, %14 : vector<128x128xf32>
    %c2 = arith.constant 2 : index
    %c0_10 = arith.constant 0 : index
    %c0_11 = arith.constant 0 : index
    %16 = vector.load %arg1[%c2, %c0_10, %c0_11] : memref<3x128x128xbf16, #tpu.memory_space<vmem>>, vector<1x128x128xbf16>
    %17 = vector.shape_cast %16 : vector<1x128x128xbf16> to vector<128x128xbf16>
    %cst_12 = arith.constant dense<0.000000e+00> : vector<128x128xf32>
    %18 = tpu.matmul %17, %0, %cst_12 {dimension_numbers = #tpu.dot_dimension_numbers<[1], [0], [0], [1], [0, 0, 1, 1], [], []>} : vector<128x128xbf16>, vector<128x128xbf16>, vector<128x128xf32> -> vector<128x128xf32>
    %19 = vector.extract_strided_slice %2 {offsets = [2, 0], sizes = [1, 128], strides = [1, 1]} : vector<3x128xf32> to vector<1x128xf32>
    %20 = vector.broadcast %19 : vector<1x128xf32> to vector<128x128xf32>
    %21 = arith.mulf %18, %20 : vector<128x128xf32>
    %22 = arith.addf %15, %21 : vector<128x128xf32>
    %23 = arith.truncf %22 : vector<128x128xf32> to vector<128x128xbf16>
    %c0_13 = arith.constant 0 : index
    %c0_14 = arith.constant 0 : index
    %c0_15 = arith.constant 0 : index
    %24 = vector.load %arg3[%c0_13, %c0_14, %c0_15] : memref<2x128x128xbf16, #tpu.memory_space<vmem>>, vector<1x128x128xbf16>
    %25 = vector.shape_cast %24 : vector<1x128x128xbf16> to vector<128x128xbf16>
    %cst_16 = arith.constant dense<0.000000e+00> : vector<128x128xf32>
    %26 = tpu.matmul %23, %25, %cst_16 {dimension_numbers = #tpu.dot_dimension_numbers<[1], [0], [0], [1], [0, 0, 1, 1], [], []>} : vector<128x128xbf16>, vector<128x128xbf16>, vector<128x128xf32> -> vector<128x128xf32>
    %c0_17 = arith.constant 0 : index
    %c0_18 = arith.constant 0 : index
    %c0_19 = arith.constant 0 : index
    %27 = vector.load %arg4[%c0_17, %c0_18, %c0_19] : memref<2x128x128xbf16, #tpu.memory_space<vmem>>, vector<1x128x128xbf16>
    %28 = vector.shape_cast %27 : vector<1x128x128xbf16> to vector<128x128xbf16>
    %cst_20 = arith.constant dense<0.000000e+00> : vector<128x128xf32>
    %29 = tpu.matmul %0, %28, %cst_20 {dimension_numbers = #tpu.dot_dimension_numbers<[1], [0], [0], [1], [0, 0, 1, 1], [], []>} : vector<128x128xbf16>, vector<128x128xbf16>, vector<128x128xf32> -> vector<128x128xf32>
    %30 = arith.addf %26, %29 : vector<128x128xf32>
    %c0_21 = arith.constant 0 : index
    %c0_22 = arith.constant 0 : index
    %c0_23 = arith.constant 0 : index
    %31 = vector.load %arg5[%c0_21, %c0_22, %c0_23] : memref<2x1x128xf32, #tpu.memory_space<vmem>>, vector<1x1x128xf32>
    %32 = vector.shape_cast %31 : vector<1x1x128xf32> to vector<1x128xf32>
    %33 = vector.broadcast %32 : vector<1x128xf32> to vector<128x128xf32>
    %34 = arith.addf %30, %33 : vector<128x128xf32>
    %cst_24 = arith.constant 0.000000e+00 : f32
    %35 = vector.broadcast %cst_24 : f32 to vector<128x128xf32>
    %36 = arith.maximumf %34, %35 : vector<128x128xf32>
    %37 = arith.truncf %36 : vector<128x128xf32> to vector<128x128xbf16>
    %c1_25 = arith.constant 1 : index
    %c0_26 = arith.constant 0 : index
    %c0_27 = arith.constant 0 : index
    %38 = vector.load %arg2[%c1_25, %c0_26, %c0_27] : memref<2x3x128xf32, #tpu.memory_space<vmem>>, vector<1x3x128xf32>
    %39 = vector.shape_cast %38 : vector<1x3x128xf32> to vector<3x128xf32>
    %c0_28 = arith.constant 0 : index
    %c0_29 = arith.constant 0 : index
    %c0_30 = arith.constant 0 : index
    %40 = vector.load %arg1[%c0_28, %c0_29, %c0_30] : memref<3x128x128xbf16, #tpu.memory_space<vmem>>, vector<1x128x128xbf16>
    %41 = vector.shape_cast %40 : vector<1x128x128xbf16> to vector<128x128xbf16>
    %cst_31 = arith.constant dense<0.000000e+00> : vector<128x128xf32>
    %42 = tpu.matmul %41, %37, %cst_31 {dimension_numbers = #tpu.dot_dimension_numbers<[1], [0], [0], [1], [0, 0, 1, 1], [], []>} : vector<128x128xbf16>, vector<128x128xbf16>, vector<128x128xf32> -> vector<128x128xf32>
    %43 = vector.extract_strided_slice %39 {offsets = [0, 0], sizes = [1, 128], strides = [1, 1]} : vector<3x128xf32> to vector<1x128xf32>
    %44 = vector.broadcast %43 : vector<1x128xf32> to vector<128x128xf32>
    %45 = arith.mulf %42, %44 : vector<128x128xf32>
    %c1_32 = arith.constant 1 : index
    %c0_33 = arith.constant 0 : index
    %c0_34 = arith.constant 0 : index
    %46 = vector.load %arg1[%c1_32, %c0_33, %c0_34] : memref<3x128x128xbf16, #tpu.memory_space<vmem>>, vector<1x128x128xbf16>
    %47 = vector.shape_cast %46 : vector<1x128x128xbf16> to vector<128x128xbf16>
    %cst_35 = arith.constant dense<0.000000e+00> : vector<128x128xf32>
    %48 = tpu.matmul %47, %37, %cst_35 {dimension_numbers = #tpu.dot_dimension_numbers<[1], [0], [0], [1], [0, 0, 1, 1], [], []>} : vector<128x128xbf16>, vector<128x128xbf16>, vector<128x128xf32> -> vector<128x128xf32>
    %49 = vector.extract_strided_slice %39 {offsets = [1, 0], sizes = [1, 128], strides = [1, 1]} : vector<3x128xf32> to vector<1x128xf32>
    %50 = vector.broadcast %49 : vector<1x128xf32> to vector<128x128xf32>
    %51 = arith.mulf %48, %50 : vector<128x128xf32>
    %52 = arith.addf %45, %51 : vector<128x128xf32>
    %c2_36 = arith.constant 2 : index
    %c0_37 = arith.constant 0 : index
    %c0_38 = arith.constant 0 : index
    %53 = vector.load %arg1[%c2_36, %c0_37, %c0_38] : memref<3x128x128xbf16, #tpu.memory_space<vmem>>, vector<1x128x128xbf16>
    %54 = vector.shape_cast %53 : vector<1x128x128xbf16> to vector<128x128xbf16>
    %cst_39 = arith.constant dense<0.000000e+00> : vector<128x128xf32>
    %55 = tpu.matmul %54, %37, %cst_39 {dimension_numbers = #tpu.dot_dimension_numbers<[1], [0], [0], [1], [0, 0, 1, 1], [], []>} : vector<128x128xbf16>, vector<128x128xbf16>, vector<128x128xf32> -> vector<128x128xf32>
    %56 = vector.extract_strided_slice %39 {offsets = [2, 0], sizes = [1, 128], strides = [1, 1]} : vector<3x128xf32> to vector<1x128xf32>
    %57 = vector.broadcast %56 : vector<1x128xf32> to vector<128x128xf32>
    %58 = arith.mulf %55, %57 : vector<128x128xf32>
    %59 = arith.addf %52, %58 : vector<128x128xf32>
    %60 = arith.truncf %59 : vector<128x128xf32> to vector<128x128xbf16>
    %c1_40 = arith.constant 1 : index
    %c0_41 = arith.constant 0 : index
    %c0_42 = arith.constant 0 : index
    %61 = vector.load %arg3[%c1_40, %c0_41, %c0_42] : memref<2x128x128xbf16, #tpu.memory_space<vmem>>, vector<1x128x128xbf16>
    %62 = vector.shape_cast %61 : vector<1x128x128xbf16> to vector<128x128xbf16>
    %cst_43 = arith.constant dense<0.000000e+00> : vector<128x128xf32>
    %63 = tpu.matmul %60, %62, %cst_43 {dimension_numbers = #tpu.dot_dimension_numbers<[1], [0], [0], [1], [0, 0, 1, 1], [], []>} : vector<128x128xbf16>, vector<128x128xbf16>, vector<128x128xf32> -> vector<128x128xf32>
    %c1_44 = arith.constant 1 : index
    %c0_45 = arith.constant 0 : index
    %c0_46 = arith.constant 0 : index
    %64 = vector.load %arg4[%c1_44, %c0_45, %c0_46] : memref<2x128x128xbf16, #tpu.memory_space<vmem>>, vector<1x128x128xbf16>
    %65 = vector.shape_cast %64 : vector<1x128x128xbf16> to vector<128x128xbf16>
    %cst_47 = arith.constant dense<0.000000e+00> : vector<128x128xf32>
    %66 = tpu.matmul %37, %65, %cst_47 {dimension_numbers = #tpu.dot_dimension_numbers<[1], [0], [0], [1], [0, 0, 1, 1], [], []>} : vector<128x128xbf16>, vector<128x128xbf16>, vector<128x128xf32> -> vector<128x128xf32>
    %67 = arith.addf %63, %66 : vector<128x128xf32>
    %c1_48 = arith.constant 1 : index
    %c0_49 = arith.constant 0 : index
    %c0_50 = arith.constant 0 : index
    %68 = vector.load %arg5[%c1_48, %c0_49, %c0_50] : memref<2x1x128xf32, #tpu.memory_space<vmem>>, vector<1x1x128xf32>
    %69 = vector.shape_cast %68 : vector<1x1x128xf32> to vector<1x128xf32>
    %70 = vector.broadcast %69 : vector<1x128xf32> to vector<128x128xf32>
    %71 = arith.addf %67, %70 : vector<128x128xf32>
    %cst_51 = arith.constant 0.000000e+00 : f32
    %72 = vector.broadcast %cst_51 : f32 to vector<128x128xf32>
    %73 = arith.maximumf %71, %72 : vector<128x128xf32>
    %74 = arith.truncf %73 : vector<128x128xf32> to vector<128x128xbf16>
    %c0_52 = arith.constant 0 : index
    %c0_53 = arith.constant 0 : index
    %75 = vector.load %arg7[%c0_52, %c0_53] : memref<128x128xf32, #tpu.memory_space<vmem>>, vector<128x128xf32>
    tpu.vector_store %arg7[%c0_52, %c0_53], %73 {strides = array<i32>} : memref<128x128xf32, #tpu.memory_space<vmem>>, vector<128x128xf32>,
    %c0_54 = arith.constant 0 : index
    %c0_55 = arith.constant 0 : index
    %76 = vector.load %arg6[%c0_54, %c0_55] : memref<8x128xbf16, #tpu.memory_space<vmem>>, vector<8x128xbf16>
    %cst_56 = arith.constant dense<0.000000e+00> : vector<8x128xf32>
    %77 = tpu.matmul %76, %74, %cst_56 {dimension_numbers = #tpu.dot_dimension_numbers<[1], [0], [0], [1], [0, 0, 1, 1], [], []>} : vector<8x128xbf16>, vector<128x128xbf16>, vector<8x128xf32> -> vector<8x128xf32>
    %c0_57 = arith.constant 0 : index
    %c0_58 = arith.constant 0 : index
    %78 = vector.load %arg8[%c0_57, %c0_58] : memref<8x128xf32, #tpu.memory_space<vmem>>, vector<8x128xf32>
    tpu.vector_store %arg8[%c0_57, %c0_58], %77 {strides = array<i32>} : memref<8x128xf32, #tpu.memory_space<vmem>>, vector<8x128xf32>,
    return
  }
}

</mosaic_0001>

<llo_original>
// kernel: glycan_compgcn_forward.1
$region0: #{glycan_compgcn_forward.1}
  #allocation0 [shape = 'u32[]', space=smem, size = 0x4, offset = 0x4, fixed_abs, tag = 'smem constant byte address 0x4 - core index']
  #allocation1 [shape = 'u32[72,128]{1,0:T(1,128)}', space=vmem, size = 0x9000, scoped, tag = 'internal scratch']
  %s0 = inlined_call_operand.vmem [shape: bf16[128,128], index: 0, kind: input, shape index: {}]
  %s1 = inlined_call_operand.hbm [shape: bf16[3,128,128], index: 1, kind: input, shape index: {}]
  %s2 = inlined_call_operand.vmem [shape: f32[2,3,128], index: 2, kind: input, shape index: {}]
  %s3 = inlined_call_operand.hbm [shape: bf16[2,128,128], index: 3, kind: input, shape index: {}]
  %s4 = inlined_call_operand.hbm [shape: bf16[2,128,128], index: 4, kind: input, shape index: {}]
  %s5 = inlined_call_operand.vmem [shape: f32[2,1,128], index: 5, kind: input, shape index: {}]
  %s6 = inlined_call_operand.vmem [shape: bf16[8,128], index: 6, kind: input, shape index: {}]
  %s7 = inlined_call_operand.vmem [shape: f32[128,128], index: 7, kind: output, shape index: {0}]
  %s8 = inlined_call_operand.vmem [shape: f32[8,128], index: 8, kind: output, shape index: {1}]
  %9 = xla_tuple %s7, %s8
  %s10 = sld [smem:[#allocation0]]
  $region58: #{glycan_compgcn_forward.1} parent=0
    _
  %s12 = ssub.s32 1, %s10
  %s13 = scalar_select 0, %s12, %s10
  $region1: #{glycan_compgcn_forward.1} parent=0
    #allocation2 [shape = 'u8[98304]{0}', space=vmem, size = 0x18000, scoped, tag = 'input window, operand 1, single buffered']
    #allocation3 [shape = 's32[1]{0}', space=sflag, size = 0x4, scoped, tag = 'scoped memory for glycan_compgcn_forward.1']
    #allocation4 [shape = 'u8[65536]{0}', space=vmem, size = 0x10000, scoped, tag = 'input window, operand 3, single buffered']
    #allocation5 [shape = 's32[1]{0}', space=sflag, size = 0x4, scoped, tag = 'scoped memory for glycan_compgcn_forward.1']
    #allocation6 [shape = 'u8[65536]{0}', space=vmem, size = 0x10000, scoped, tag = 'input window, operand 4, single buffered']
    %14 = vsyncpa [#allocation3], 0
    %15 = vsyncpa [#allocation5], 0
    // Predicated region
    $region2: #{glycan_compgcn_forward.1} parent=1 // pred_check
      _
    $region3: #{glycan_compgcn_forward.1} parent=1 // pred_check_branch
      %17 = sbr.rel (0) target = $region5
    $region4: #{glycan_compgcn_forward.1} parent=1 // pred_region
      _
    $region5: #{glycan_compgcn_forward.1} parent=1 // pred_fallthru
      _
    // Predicated region
    $region6: #{glycan_compgcn_forward.1} parent=1 // pred_check
      _
    $region7: #{glycan_compgcn_forward.1} parent=1 // pred_check_branch
      %19 = sbr.rel (0) target = $region9
    $region8: #{glycan_compgcn_forward.1} parent=1 // pred_region
      %21 = vsyncadd [#allocation3], 0
      %s22 = sshll.u32 %s1, 4
      %s23 = int_to_ptr.hbm [resolvable:$true] %s22
      %s24 = sshll.u32 [#allocation2], 4
      %s25 = int_to_ptr.vmem [resolvable:$true] %s24
      %30 = dma.hbm_to_vmem [thread:$0]  %s23, 3072, %s25, [#allocation3], 64, 64, 4
    $region9: #{glycan_compgcn_forward.1} parent=1 // pred_fallthru
      _
    // Predicated region
    $region10: #{glycan_compgcn_forward.1} parent=1 // pred_check
      _
    $region11: #{glycan_compgcn_forward.1} parent=1 // pred_check_branch
      %32 = sbr.rel (0) target = $region13
    $region12: #{glycan_compgcn_forward.1} parent=1 // pred_region
      _
    $region13: #{glycan_compgcn_forward.1} parent=1 // pred_fallthru
      _
    // Predicated region
    $region14: #{glycan_compgcn_forward.1} parent=1 // pred_check
      _
    $region15: #{glycan_compgcn_forward.1} parent=1 // pred_check_branch
      %34 = sbr.rel (0) target = $region17
    $region16: #{glycan_compgcn_forward.1} parent=1 // pred_region
      %36 = vsyncadd [#allocation5], 0
      %s37 = sshll.u32 %s3, 4
      %s38 = int_to_ptr.hbm [resolvable:$true] %s37
      %s39 = sshll.u32 [#allocation4], 4
      %s40 = int_to_ptr.vmem [resolvable:$true] %s39
      %45 = dma.hbm_to_vmem [thread:$0]  %s38, 2048, %s40, [#allocation5], 64, 64, 4
    $region17: #{glycan_compgcn_forward.1} parent=1 // pred_fallthru
      _
    // Predicated region
    $region18: #{glycan_compgcn_forward.1} parent=1 // pred_check
      _
    $region19: #{glycan_compgcn_forward.1} parent=1 // pred_check_branch
      %47 = sbr.rel (0) target = $region21
    $region20: #{glycan_compgcn_forward.1} parent=1 // pred_region
      %49 = vsyncadd [#allocation5], 0
      %s50 = sshll.u32 %s4, 4
      %s51 = int_to_ptr.hbm [resolvable:$true] %s50
      %s52 = sshll.u32 [#allocation6], 4
      %s53 = int_to_ptr.vmem [resolvable:$true] %s52
      %58 = dma.hbm_to_vmem [thread:$0]  %s51, 2048, %s53, [#allocation5], 64, 64, 4
    $region21: #{glycan_compgcn_forward.1} parent=1 // pred_fallthru
      _
    // Predicated region
    $region22: #{glycan_compgcn_forward.1} parent=1 // pred_check
      _
    $region23: #{glycan_compgcn_forward.1} parent=1 // pred_check_branch
      %60 = sbr.rel (0) target = $region25
    $region24: #{glycan_compgcn_forward.1} parent=1 // pred_region
      _
    $region25: #{glycan_compgcn_forward.1} parent=1 // pred_fallthru
      _
    // Predicated region
    $region26: #{glycan_compgcn_forward.1} parent=1 // pred_check
      _
    $region27: #{glycan_compgcn_forward.1} parent=1 // pred_check_branch
      %62 = sbr.rel (0) target = $region29
    $region28: #{glycan_compgcn_forward.1} parent=1 // pred_region
      _
    $region29: #{glycan_compgcn_forward.1} parent=1 // pred_fallthru
      _
    // Predicated region
    $region30: #{glycan_compgcn_forward.1} parent=1 // pred_check
      _
    $region31: #{glycan_compgcn_forward.1} parent=1 // pred_check_branch
      %64 = sbr.rel (0) target = $region33
    $region32: #{glycan_compgcn_forward.1} parent=1 // pred_region
      %66 = dma.done [#allocation3], 3072
    $region33: #{glycan_compgcn_forward.1} parent=1 // pred_fallthru
      _
    // Predicated region
    $region34: #{glycan_compgcn_forward.1} parent=1 // pred_check
      _
    $region35: #{glycan_compgcn_forward.1} parent=1 // pred_check_branch
      %68 = sbr.rel (0) target = $region37
    $region36: #{glycan_compgcn_forward.1} parent=1 // pred_region
      %70 = dma.done [#allocation5], 2048
    $region37: #{glycan_compgcn_forward.1} parent=1 // pred_fallthru
      _
    // Predicated region
    $region38: #{glycan_compgcn_forward.1} parent=1 // pred_check
      _
    $region39: #{glycan_compgcn_forward.1} parent=1 // pred_check_branch
      %72 = sbr.rel (0) target = $region41
    $region40: #{glycan_compgcn_forward.1} parent=1 // pred_region
      %74 = dma.done [#allocation5], 2048
    $region41: #{glycan_compgcn_forward.1} parent=1 // pred_fallthru
      _
    %v75 = vld [vmem:[%s0] sm:$0xf]
    %v76 = vld [vmem:[%s0 + $0x4] sm:$0xf]
    %v77 = vld [vmem:[%s0 + $0x8] sm:$0xf]
    %v78 = vld [vmem:[%s0 + $0xc] sm:$0xf]
    %v79 = vld [vmem:[%s0 + $0x10] sm:$0xf]
    %v80 = vld [vmem:[%s0 + $0x14] sm:$0xf]
    %v81 = vld [vmem:[%s0 + $0x18] sm:$0xf]
    %v82 = vld [vmem:[%s0 + $0x1c] sm:$0xf]
    %v83 = vld [vmem:[%s0 + $0x20] sm:$0xf]
    %v84 = vld [vmem:[%s0 + $0x24] sm:$0xf]
    %v85 = vld [vmem:[%s0 + $0x28] sm:$0xf]
    %v86 = vld [vmem:[%s0 + $0x2c] sm:$0xf]
    %v87 = vld [vmem:[%s0 + $0x30] sm:$0xf]
    %v88 = vld [vmem:[%s0 + $0x34] sm:$0xf]
    %v89 = vld [vmem:[%s0 + $0x38] sm:$0xf]
    %v90 = vld [vmem:[%s0 + $0x3c] sm:$0xf]
    %v91 = vld [vmem:[%s2] sm:$0x7]
    %v92 = vld [vmem:[#allocation2] sm:$0xf]
    %v93 = vld [vmem:[#allocation2 + $0x4] sm:$0xf]
    %v94 = vld [vmem:[#allocation2 + $0x8] sm:$0xf]
    %v95 = vld [vmem:[#allocation2 + $0xc] sm:$0xf]
    %v96 = vld [vmem:[#allocation2 + $0x10] sm:$0xf]
    %v97 = vld [vmem:[#allocation2 + $0x14] sm:$0xf]
    %v98 = vld [vmem:[#allocation2 + $0x18] sm:$0xf]
    %v99 = vld [vmem:[#allocation2 + $0x1c] sm:$0xf]
    %v100 = vld [vmem:[#allocation2 + $0x20] sm:$0xf]
    %v101 = vld [vmem:[#allocation2 + $0x24] sm:$0xf]
    %v102 = vld [vmem:[#allocation2 + $0x28] sm:$0xf]
    %v103 = vld [vmem:[#allocation2 + $0x2c] sm:$0xf]
    %v104 = vld [vmem:[#allocation2 + $0x30] sm:$0xf]
    %v105 = vld [vmem:[#allocation2 + $0x34] sm:$0xf]
    %v106 = vld [vmem:[#allocation2 + $0x38] sm:$0xf]
    %v107 = vld [vmem:[#allocation2 + $0x3c] sm:$0xf]
    %v124 = vunpack.c.l.b16 %v92
    %v125 = vunpack.c.l.b16 %v93
    %v126 = vunpack.c.l.b16 %v94
    %v127 = vunpack.c.l.b16 %v95
    %v128 = vunpack.c.l.b16 %v96
    %v129 = vunpack.c.l.b16 %v97
    %v130 = vunpack.c.l.b16 %v98
    %v131 = vunpack.c.l.b16 %v99
    %v132 = vunpack.c.l.b16 %v100
    %v133 = vunpack.c.l.b16 %v101
    %v134 = vunpack.c.l.b16 %v102
    %v135 = vunpack.c.l.b16 %v103
    %v136 = vunpack.c.l.b16 %v104
    %v137 = vunpack.c.l.b16 %v105
    %v138 = vunpack.c.l.b16 %v106
    %v139 = vunpack.c.l.b16 %v107
    %v140 = vpack.c.b16 %v125, %v124
    %v141 = vpack.c.b16 %v127, %v126
    %v142 = vpack.c.b16 %v129, %v128
    %v143 = vpack.c.b16 %v131, %v130
    %v144 = vpack.c.b16 %v133, %v132
    %v145 = vpack.c.b16 %v135, %v134
    %v146 = vpack.c.b16 %v137, %v136
    %v147 = vpack.c.b16 %v139, %v138
    %v172 = vunpack.c.l.b16 %v75
    %v173 = vunpack.c.l.b16 %v76
    %v174 = vunpack.c.l.b16 %v77
    %v175 = vunpack.c.l.b16 %v78
    %v176 = vunpack.c.l.b16 %v79
    %v177 = vunpack.c.l.b16 %v80
    %v178 = vunpack.c.l.b16 %v81
    %v179 = vunpack.c.l.b16 %v82
    %v180 = vunpack.c.l.b16 %v83
    %v181 = vunpack.c.l.b16 %v84
    %v182 = vunpack.c.l.b16 %v85
    %v183 = vunpack.c.l.b16 %v86
    %v184 = vunpack.c.l.b16 %v87
    %v185 = vunpack.c.l.b16 %v88
    %v186 = vunpack.c.l.b16 %v89
    %v187 = vunpack.c.l.b16 %v90
    %v188 = vpack.c.b16 %v173, %v172
    %v189 = vpack.c.b16 %v175, %v174
    %v190 = vpack.c.b16 %v177, %v176
    %v191 = vpack.c.b16 %v179, %v178
    %v192 = vpack.c.b16 %v181, %v180
    %v193 = vpack.c.b16 %v183, %v182
    %v194 = vpack.c.b16 %v185, %v184
    %v195 = vpack.c.b16 %v187, %v186
    %204 = vmatpush.bf16.msra.mxu0 %v195
    %205 = vmatpush.bf16.msra.mxu0 %v194
    %206 = vmatpush.bf16.msra.mxu0 %v193
    %207 = vmatpush.bf16.msra.mxu0 %v192
    %208 = vmatpush.bf16.msra.mxu0 %v191
    %209 = vmatpush.bf16.msra.mxu0 %v190
    %210 = vmatpush.bf16.msra.mxu0 %v189
    %211 = vmatpush.bf16.msra.mxu0 %v188
    %212 = vmatmul.bf16.gmra.mxu0 %v140
    %v213 = vpop.f32.mrf.mxu0
    %v214 = vadd.f32 0.0, %v213
    %v215 = vpop.f32.mrf.mxu0
    %v216 = vadd.f32 0.0, %v215
    %217 = vmatmul.bf16.gmra.mxu0 %v141
    %v218 = vpop.f32.mrf.mxu0
    %v219 = vadd.f32 0.0, %v218
    %v220 = vpop.f32.mrf.mxu0
    %v221 = vadd.f32 0.0, %v220
    %222 = vmatmul.bf16.gmra.mxu0 %v142
    %v223 = vpop.f32.mrf.mxu0
    %v224 = vadd.f32 0.0, %v223
    %v225 = vpop.f32.mrf.mxu0
    %v226 = vadd.f32 0.0, %v225
    %227 = vmatmul.bf16.gmra.mxu0 %v143
    %v228 = vpop.f32.mrf.mxu0
    %v229 = vadd.f32 0.0, %v228
    %v230 = vpop.f32.mrf.mxu0
    %v231 = vadd.f32 0.0, %v230
    %232 = vmatmul.bf16.gmra.mxu0 %v144
    %v233 = vpop.f32.mrf.mxu0
    %v234 = vadd.f32 0.0, %v233
    %v235 = vpop.f32.mrf.mxu0
    %v236 = vadd.f32 0.0, %v235
    %237 = vmatmul.bf16.gmra.mxu0 %v145
    %v238 = vpop.f32.mrf.mxu0
    %v239 = vadd.f32 0.0, %v238
    %v240 = vpop.f32.mrf.mxu0
    %v241 = vadd.f32 0.0, %v240
    %242 = vmatmul.bf16.gmra.mxu0 %v146
    %v243 = vpop.f32.mrf.mxu0
    %v244 = vadd.f32 0.0, %v243
    %v245 = vpop.f32.mrf.mxu0
    %v246 = vadd.f32 0.0, %v245
    %247 = vmatmul.bf16.gmra.mxu0 %v147
    %v248 = vpop.f32.mrf.mxu0
    %v249 = vadd.f32 0.0, %v248
    %v250 = vpop.f32.mrf.mxu0
    %v251 = vadd.f32 0.0, %v250
    %252 = vdwg.mxu0
    %v253 = vperm.slane %v91, 0
    %v254 = vmul.f32 %v214, %v253
    %v255 = vmul.f32 %v216, %v253
    %v256 = vmul.f32 %v219, %v253
    %v257 = vmul.f32 %v221, %v253
    %v258 = vmul.f32 %v224, %v253
    %v259 = vmul.f32 %v226, %v253
    %v260 = vmul.f32 %v229, %v253
    %v261 = vmul.f32 %v231, %v253
    %v262 = vmul.f32 %v234, %v253
    %v263 = vmul.f32 %v236, %v253
    %v264 = vmul.f32 %v239, %v253
    %v265 = vmul.f32 %v241, %v253
    %v266 = vmul.f32 %v244, %v253
    %v267 = vmul.f32 %v246, %v253
    %v268 = vmul.f32 %v249, %v253
    %v269 = vmul.f32 %v251, %v253
    %s270 = scalar_lea.vmem [#allocation2], 64
    %v271 = vld [vmem:[%s270] sm:$0xf]
    %v272 = vld [vmem:[%s270 + $0x4] sm:$0xf]
    %v273 = vld [vmem:[%s270 + $0x8] sm:$0xf]
    %v274 = vld [vmem:[%s270 + $0xc] sm:$0xf]
    %v275 = vld [vmem:[%s270 + $0x10] sm:$0xf]
    %v276 = vld [vmem:[%s270 + $0x14] sm:$0xf]
    %v277 = vld [vmem:[%s270 + $0x18] sm:$0xf]
    %v278 = vld [vmem:[%s270 + $0x1c] sm:$0xf]
    %v279 = vld [vmem:[%s270 + $0x20] sm:$0xf]
    %v280 = vld [vmem:[%s270 + $0x24] sm:$0xf]
    %v281 = vld [vmem:[%s270 + $0x28] sm:$0xf]
    %v282 = vld [vmem:[%s270 + $0x2c] sm:$0xf]
    %v283 = vld [vmem:[%s270 + $0x30] sm:$0xf]
    %v284 = vld [vmem:[%s270 + $0x34] sm:$0xf]
    %v285 = vld [vmem:[%s270 + $0x38] sm:$0xf]
    %v286 = vld [vmem:[%s270 + $0x3c] sm:$0xf]
    %v303 = vunpack.c.l.b16 %v271
    %v304 = vunpack.c.l.b16 %v272
    %v305 = vunpack.c.l.b16 %v273
    %v306 = vunpack.c.l.b16 %v274
    %v307 = vunpack.c.l.b16 %v275
    %v308 = vunpack.c.l.b16 %v276
    %v309 = vunpack.c.l.b16 %v277
    %v310 = vunpack.c.l.b16 %v278
    %v311 = vunpack.c.l.b16 %v279
    %v312 = vunpack.c.l.b16 %v280
    %v313 = vunpack.c.l.b16 %v281
    %v314 = vunpack.c.l.b16 %v282
    %v315 = vunpack.c.l.b16 %v283
    %v316 = vunpack.c.l.b16 %v284
    %v317 = vunpack.c.l.b16 %v285
    %v318 = vunpack.c.l.b16 %v286
    %v319 = vpack.c.b16 %v304, %v303
    %v320 = vpack.c.b16 %v306, %v305
    %v321 = vpack.c.b16 %v308, %v307
    %v322 = vpack.c.b16 %v310, %v309
    %v323 = vpack.c.b16 %v312, %v311
    %v324 = vpack.c.b16 %v314, %v313
    %v325 = vpack.c.b16 %v316, %v315
    %v326 = vpack.c.b16 %v318, %v317
    %335 = vmatpush.bf16.msra.mxu0 %v195
    %336 = vmatpush.bf16.msra.mxu0 %v194
    %337 = vmatpush.bf16.msra.mxu0 %v193
    %338 = vmatpush.bf16.msra.mxu0 %v192
    %339 = vmatpush.bf16.msra.mxu0 %v191
    %340 = vmatpush.bf16.msra.mxu0 %v190
    %341 = vmatpush.bf16.msra.mxu0 %v189
    %342 = vmatpush.bf16.msra.mxu0 %v188
    %343 = vmatmul.bf16.gmra.mxu0 %v319
    %v344 = vpop.f32.mrf.mxu0
    %v345 = vadd.f32 0.0, %v344
    %v346 = vpop.f32.mrf.mxu0
    %v347 = vadd.f32 0.0, %v346
    %348 = vmatmul.bf16.gmra.mxu0 %v320
    %v349 = vpop.f32.mrf.mxu0
    %v350 = vadd.f32 0.0, %v349
    %v351 = vpop.f32.mrf.mxu0
    %v352 = vadd.f32 0.0, %v351
    %353 = vmatmul.bf16.gmra.mxu0 %v321
    %v354 = vpop.f32.mrf.mxu0
    %v355 = vadd.f32 0.0, %v354
    %v356 = vpop.f32.mrf.mxu0
    %v357 = vadd.f32 0.0, %v356
    %358 = vmatmul.bf16.gmra.mxu0 %v322
    %v359 = vpop.f32.mrf.mxu0
    %v360 = vadd.f32 0.0, %v359
    %v361 = vpop.f32.mrf.mxu0
    %v362 = vadd.f32 0.0, %v361
    %363 = vmatmul.bf16.gmra.mxu0 %v323
    %v364 = vpop.f32.mrf.mxu0
    %v365 = vadd.f32 0.0, %v364
    %v366 = vpop.f32.mrf.mxu0
    %v367 = vadd.f32 0.0, %v366
    %368 = vmatmul.bf16.gmra.mxu0 %v324
    %v369 = vpop.f32.mrf.mxu0
    %v370 = vadd.f32 0.0, %v369
    %v371 = vpop.f32.mrf.mxu0
    %v372 = vadd.f32 0.0, %v371
    %373 = vmatmul.bf16.gmra.mxu0 %v325
    %v374 = vpop.f32.mrf.mxu0
    %v375 = vadd.f32 0.0, %v374
    %v376 = vpop.f32.mrf.mxu0
    %v377 = vadd.f32 0.0, %v376
    %378 = vmatmul.bf16.gmra.mxu0 %v326
    %v379 = vpop.f32.mrf.mxu0
    %v380 = vadd.f32 0.0, %v379
    %v381 = vpop.f32.mrf.mxu0
    %v382 = vadd.f32 0.0, %v381
    %383 = vdwg.mxu0
    %v384 = vperm.slane %v91, 1
    %v385 = vmul.f32 %v345, %v384
    %v386 = vmul.f32 %v347, %v384
    %v387 = vmul.f32 %v350, %v384
    %v388 = vmul.f32 %v352, %v384
    %v389 = vmul.f32 %v355, %v384
    %v390 = vmul.f32 %v357, %v384
    %v391 = vmul.f32 %v360, %v384
    %v392 = vmul.f32 %v362, %v384
    %v393 = vmul.f32 %v365, %v384
    %v394 = vmul.f32 %v367, %v384
    %v395 = vmul.f32 %v370, %v384
    %v396 = vmul.f32 %v372, %v384
    %v397 = vmul.f32 %v375, %v384
    %v398 = vmul.f32 %v377, %v384
    %v399 = vmul.f32 %v380, %v384
    %v400 = vmul.f32 %v382, %v384
    %v401 = vadd.f32 %v254, %v385
    %v402 = vadd.f32 %v255, %v386
    %v403 = vadd.f32 %v256, %v387
    %v404 = vadd.f32 %v257, %v388
    %v405 = vadd.f32 %v258, %v389
    %v406 = vadd.f32 %v259, %v390
    %v407 = vadd.f32 %v260, %v391
    %v408 = vadd.f32 %v261, %v392
    %v409 = vadd.f32 %v262, %v393
    %v410 = vadd.f32 %v263, %v394
    %v411 = vadd.f32 %v264, %v395
    %v412 = vadd.f32 %v265, %v396
    %v413 = vadd.f32 %v266, %v397
    %v414 = vadd.f32 %v267, %v398
    %v415 = vadd.f32 %v268, %v399
    %v416 = vadd.f32 %v269, %v400
    %s417 = scalar_lea.vmem [#allocation2], 128
    %v418 = vld [vmem:[%s417] sm:$0xf]
    %v419 = vld [vmem:[%s417 + $0x4] sm:$0xf]
    %v420 = vld [vmem:[%s417 + $0x8] sm:$0xf]
    %v421 = vld [vmem:[%s417 + $0xc] sm:$0xf]
    %v422 = vld [vmem:[%s417 + $0x10] sm:$0xf]
    %v423 = vld [vmem:[%s417 + $0x14] sm:$0xf]
    %v424 = vld [vmem:[%s417 + $0x18] sm:$0xf]
    %v425 = vld [vmem:[%s417 + $0x1c] sm:$0xf]
    %v426 = vld [vmem:[%s417 + $0x20] sm:$0xf]
    %v427 = vld [vmem:[%s417 + $0x24] sm:$0xf]
    %v428 = vld [vmem:[%s417 + $0x28] sm:$0xf]
    %v429 = vld [vmem:[%s417 + $0x2c] sm:$0xf]
    %v430 = vld [vmem:[%s417 + $0x30] sm:$0xf]
    %v431 = vld [vmem:[%s417 + $0x34] sm:$0xf]
    %v432 = vld [vmem:[%s417 + $0x38] sm:$0xf]
    %v433 = vld [vmem:[%s417 + $0x3c] sm:$0xf]
    %v450 = vunpack.c.l.b16 %v418
    %v451 = vunpack.c.l.b16 %v419
    %v452 = vunpack.c.l.b16 %v420
    %v453 = vunpack.c.l.b16 %v421
    %v454 = vunpack.c.l.b16 %v422
    %v455 = vunpack.c.l.b16 %v423
    %v456 = vunpack.c.l.b16 %v424
    %v457 = vunpack.c.l.b16 %v425
    %v458 = vunpack.c.l.b16 %v426
    %v459 = vunpack.c.l.b16 %v427
    %v460 = vunpack.c.l.b16 %v428
    %v461 = vunpack.c.l.b16 %v429
    %v462 = vunpack.c.l.b16 %v430
    %v463 = vunpack.c.l.b16 %v431
    %v464 = vunpack.c.l.b16 %v432
    %v465 = vunpack.c.l.b16 %v433
    %v466 = vpack.c.b16 %v451, %v450
    %v467 = vpack.c.b16 %v453, %v452
    %v468 = vpack.c.b16 %v455, %v454
    %v469 = vpack.c.b16 %v457, %v456
    %v470 = vpack.c.b16 %v459, %v458
    %v471 = vpack.c.b16 %v461, %v460
    %v472 = vpack.c.b16 %v463, %v462
    %v473 = vpack.c.b16 %v465, %v464
    %482 = vmatpush.bf16.msra.mxu0 %v195
    %483 = vmatpush.bf16.msra.mxu0 %v194
    %484 = vmatpush.bf16.msra.mxu0 %v193
    %485 = vmatpush.bf16.msra.mxu0 %v192
    %486 = vmatpush.bf16.msra.mxu0 %v191
    %487 = vmatpush.bf16.msra.mxu0 %v190
    %488 = vmatpush.bf16.msra.mxu0 %v189
    %489 = vmatpush.bf16.msra.mxu0 %v188
    %490 = vmatmul.bf16.gmra.mxu0 %v466
    %v491 = vpop.f32.mrf.mxu0
    %v492 = vadd.f32 0.0, %v491
    %v493 = vpop.f32.mrf.mxu0
    %v494 = vadd.f32 0.0, %v493
    %495 = vmatmul.bf16.gmra.mxu0 %v467
    %v496 = vpop.f32.mrf.mxu0
    %v497 = vadd.f32 0.0, %v496
    %v498 = vpop.f32.mrf.mxu0
    %v499 = vadd.f32 0.0, %v498
    %500 = vmatmul.bf16.gmra.mxu0 %v468
    %v501 = vpop.f32.mrf.mxu0
    %v502 = vadd.f32 0.0, %v501
    %v503 = vpop.f32.mrf.mxu0
    %v504 = vadd.f32 0.0, %v503
    %505 = vmatmul.bf16.gmra.mxu0 %v469
    %v506 = vpop.f32.mrf.mxu0
    %v507 = vadd.f32 0.0, %v506
    %v508 = vpop.f32.mrf.mxu0
    %v509 = vadd.f32 0.0, %v508
    %510 = vmatmul.bf16.gmra.mxu0 %v470
    %v511 = vpop.f32.mrf.mxu0
    %v512 = vadd.f32 0.0, %v511
    %v513 = vpop.f32.mrf.mxu0
    %v514 = vadd.f32 0.0, %v513
    %515 = vmatmul.bf16.gmra.mxu0 %v471
    %v516 = vpop.f32.mrf.mxu0
    %v517 = vadd.f32 0.0, %v516
    %v518 = vpop.f32.mrf.mxu0
    %v519 = vadd.f32 0.0, %v518
    %520 = vmatmul.bf16.gmra.mxu0 %v472
    %v521 = vpop.f32.mrf.mxu0
    %v522 = vadd.f32 0.0, %v521
    %v523 = vpop.f32.mrf.mxu0
    %v524 = vadd.f32 0.0, %v523
    %525 = vmatmul.bf16.gmra.mxu0 %v473
    %v526 = vpop.f32.mrf.mxu0
    %v527 = vadd.f32 0.0, %v526
    %v528 = vpop.f32.mrf.mxu0
    %v529 = vadd.f32 0.0, %v528
    %530 = vdwg.mxu0
    %v531 = vperm.slane %v91, 2
    %v532 = vmul.f32 %v492, %v531
    %v533 = vmul.f32 %v494, %v531
    %v534 = vmul.f32 %v497, %v531
    %v535 = vmul.f32 %v499, %v531
    %v536 = vmul.f32 %v502, %v531
    %v537 = vmul.f32 %v504, %v531
    %v538 = vmul.f32 %v507, %v531
    %v539 = vmul.f32 %v509, %v531
    %v540 = vmul.f32 %v512, %v531
    %v541 = vmul.f32 %v514, %v531
    %v542 = vmul.f32 %v517, %v531
    %v543 = vmul.f32 %v519, %v531
    %v544 = vmul.f32 %v522, %v531
    %v545 = vmul.f32 %v524, %v531
    %v546 = vmul.f32 %v527, %v531
    %v547 = vmul.f32 %v529, %v531
    %v548 = vadd.f32 %v401, %v532
    %v549 = vadd.f32 %v402, %v533
    %v550 = vadd.f32 %v403, %v534
    %v551 = vadd.f32 %v404, %v535
    %v552 = vadd.f32 %v405, %v536
    %v553 = vadd.f32 %v406, %v537
    %v554 = vadd.f32 %v407, %v538
    %v555 = vadd.f32 %v408, %v539
    %v556 = vadd.f32 %v409, %v540
    %v557 = vadd.f32 %v410, %v541
    %v558 = vadd.f32 %v411, %v542
    %v559 = vadd.f32 %v412, %v543
    %v560 = vadd.f32 %v413, %v544
    %v561 = vadd.f32 %v414, %v545
    %v562 = vadd.f32 %v415, %v546
    %v563 = vadd.f32 %v416, %v547
    %v564 = vpack.c.bf16 %v549, %v548
    %v565 = vpack.c.bf16 %v551, %v550
    %v566 = vpack.c.bf16 %v553, %v552
    %v567 = vpack.c.bf16 %v555, %v554
    %v568 = vpack.c.bf16 %v557, %v556
    %v569 = vpack.c.bf16 %v559, %v558
    %v570 = vpack.c.bf16 %v561, %v560
    %v571 = vpack.c.bf16 %v563, %v562
    %v572 = vld [vmem:[#allocation4] sm:$0xf]
    %v573 = vld [vmem:[#allocation4 + $0x4] sm:$0xf]
    %v574 = vld [vmem:[#allocation4 + $0x8] sm:$0xf]
    %v575 = vld [vmem:[#allocation4 + $0xc] sm:$0xf]
    %v576 = vld [vmem:[#allocation4 + $0x10] sm:$0xf]
    %v577 = vld [vmem:[#allocation4 + $0x14] sm:$0xf]
    %v578 = vld [vmem:[#allocation4 + $0x18] sm:$0xf]
    %v579 = vld [vmem:[#allocation4 + $0x1c] sm:$0xf]
    %v580 = vld [vmem:[#allocation4 + $0x20] sm:$0xf]
    %v581 = vld [vmem:[#allocation4 + $0x24] sm:$0xf]
    %v582 = vld [vmem:[#allocation4 + $0x28] sm:$0xf]
    %v583 = vld [vmem:[#allocation4 + $0x2c] sm:$0xf]
    %v584 = vld [vmem:[#allocation4 + $0x30] sm:$0xf]
    %v585 = vld [vmem:[#allocation4 + $0x34] sm:$0xf]
    %v586 = vld [vmem:[#allocation4 + $0x38] sm:$0xf]
    %v587 = vld [vmem:[#allocation4 + $0x3c] sm:$0xf]
    %v588 = vld [vmem:[#allocation6] sm:$0xf]
    %v589 = vld [vmem:[#allocation6 + $0x4] sm:$0xf]
    %v590 = vld [vmem:[#allocation6 + $0x8] sm:$0xf]
    %v591 = vld [vmem:[#allocation6 + $0xc] sm:$0xf]
    %v592 = vld [vmem:[#allocation6 + $0x10] sm:$0xf]
    %v593 = vld [vmem:[#allocation6 + $0x14] sm:$0xf]
    %v594 = vld [vmem:[#allocation6 + $0x18] sm:$0xf]
    %v595 = vld [vmem:[#allocation6 + $0x1c] sm:$0xf]
    %v596 = vld [vmem:[#allocation6 + $0x20] sm:$0xf]
    %v597 = vld [vmem:[#allocation6 + $0x24] sm:$0xf]
    %v598 = vld [vmem:[#allocation6 + $0x28] sm:$0xf]
    %v599 = vld [vmem:[#allocation6 + $0x2c] sm:$0xf]
    %v600 = vld [vmem:[#allocation6 + $0x30] sm:$0xf]
    %v601 = vld [vmem:[#allocation6 + $0x34] sm:$0xf]
    %v602 = vld [vmem:[#allocation6 + $0x38] sm:$0xf]
    %v603 = vld [vmem:[#allocation6 + $0x3c] sm:$0xf]
    %v620 = vunpack.c.l.b16 %v588
    %v621 = vunpack.c.l.b16 %v589
    %v622 = vunpack.c.l.b16 %v590
    %v623 = vunpack.c.l.b16 %v591
    %v624 = vunpack.c.l.b16 %v592
    %v625 = vunpack.c.l.b16 %v593
    %v626 = vunpack.c.l.b16 %v594
    %v627 = vunpack.c.l.b16 %v595
    %v628 = vunpack.c.l.b16 %v596
    %v629 = vunpack.c.l.b16 %v597
    %v630 = vunpack.c.l.b16 %v598
    %v631 = vunpack.c.l.b16 %v599
    %v632 = vunpack.c.l.b16 %v600
    %v633 = vunpack.c.l.b16 %v601
    %v634 = vunpack.c.l.b16 %v602
    %v635 = vunpack.c.l.b16 %v603
    %v636 = vpack.c.b16 %v621, %v620
    %v637 = vpack.c.b16 %v623, %v622
    %v638 = vpack.c.b16 %v625, %v624
    %v639 = vpack.c.b16 %v627, %v626
    %v640 = vpack.c.b16 %v629, %v628
    %v641 = vpack.c.b16 %v631, %v630
    %v642 = vpack.c.b16 %v633, %v632
    %v643 = vpack.c.b16 %v635, %v634
    %652 = vmatpush.bf16.msra.mxu0 %v643
    %653 = vmatpush.bf16.msra.mxu0 %v642
    %654 = vmatpush.bf16.msra.mxu0 %v641
    %655 = vmatpush.bf16.msra.mxu0 %v640
    %656 = vmatpush.bf16.msra.mxu0 %v639
    %657 = vmatpush.bf16.msra.mxu0 %v638
    %658 = vmatpush.bf16.msra.mxu0 %v637
    %659 = vmatpush.bf16.msra.mxu0 %v636
    %660 = vmatmul.bf16.gmra.mxu0 %v188
    %v661 = vpop.f32.mrf.mxu0
    %v662 = vadd.f32 0.0, %v661
    %v663 = vpop.f32.mrf.mxu0
    %v664 = vadd.f32 0.0, %v663
    %665 = vmatmul.bf16.gmra.mxu0 %v189
    %v666 = vpop.f32.mrf.mxu0
    %v667 = vadd.f32 0.0, %v666
    %v668 = vpop.f32.mrf.mxu0
    %v669 = vadd.f32 0.0, %v668
    %670 = vmatmul.bf16.gmra.mxu0 %v190
    %v671 = vpop.f32.mrf.mxu0
    %v672 = vadd.f32 0.0, %v671
    %v673 = vpop.f32.mrf.mxu0
    %v674 = vadd.f32 0.0, %v673
    %675 = vmatmul.bf16.gmra.mxu0 %v191
    %v676 = vpop.f32.mrf.mxu0
    %v677 = vadd.f32 0.0, %v676
    %v678 = vpop.f32.mrf.mxu0
    %v679 = vadd.f32 0.0, %v678
    %680 = vmatmul.bf16.gmra.mxu0 %v192
    %v681 = vpop.f32.mrf.mxu0
    %v682 = vadd.f32 0.0, %v681
    %v683 = vpop.f32.mrf.mxu0
    %v684 = vadd.f32 0.0, %v683
    %685 = vmatmul.bf16.gmra.mxu0 %v193
    %v686 = vpop.f32.mrf.mxu0
    %v687 = vadd.f32 0.0, %v686
    %v688 = vpop.f32.mrf.mxu0
    %v689 = vadd.f32 0.0, %v688
    %690 = vmatmul.bf16.gmra.mxu0 %v194
    %v691 = vpop.f32.mrf.mxu0
    %v692 = vadd.f32 0.0, %v691
    %v693 = vpop.f32.mrf.mxu0
    %v694 = vadd.f32 0.0, %v693
    %695 = vmatmul.bf16.gmra.mxu0 %v195
    %v696 = vpop.f32.mrf.mxu0
    %v697 = vadd.f32 0.0, %v696
    %v698 = vpop.f32.mrf.mxu0
    %v699 = vadd.f32 0.0, %v698
    %700 = vdwg.mxu0
    %v717 = vunpack.c.l.b16 %v572
    %v718 = vunpack.c.l.b16 %v573
    %v719 = vunpack.c.l.b16 %v574
    %v720 = vunpack.c.l.b16 %v575
    %v721 = vunpack.c.l.b16 %v576
    %v722 = vunpack.c.l.b16 %v577
    %v723 = vunpack.c.l.b16 %v578
    %v724 = vunpack.c.l.b16 %v579
    %v725 = vunpack.c.l.b16 %v580
    %v726 = vunpack.c.l.b16 %v581
    %v727 = vunpack.c.l.b16 %v582
    %v728 = vunpack.c.l.b16 %v583
    %v729 = vunpack.c.l.b16 %v584
    %v730 = vunpack.c.l.b16 %v585
    %v731 = vunpack.c.l.b16 %v586
    %v732 = vunpack.c.l.b16 %v587
    %v733 = vpack.c.b16 %v718, %v717
    %v734 = vpack.c.b16 %v720, %v719
    %v735 = vpack.c.b16 %v722, %v721
    %v736 = vpack.c.b16 %v724, %v723
    %v737 = vpack.c.b16 %v726, %v725
    %v738 = vpack.c.b16 %v728, %v727
    %v739 = vpack.c.b16 %v730, %v729
    %v740 = vpack.c.b16 %v732, %v731
    %749 = vmatpush.bf16.msra.mxu0 %v740
    %750 = vmatpush.bf16.msra.mxu0 %v739
    %751 = vmatpush.bf16.msra.mxu0 %v738
    %752 = vmatpush.bf16.msra.mxu0 %v737
    %753 = vmatpush.bf16.msra.mxu0 %v736
    %754 = vmatpush.bf16.msra.mxu0 %v735
    %755 = vmatpush.bf16.msra.mxu0 %v734
    %756 = vmatpush.bf16.msra.mxu0 %v733
    %757 = vmatmul.bf16.gmra.mxu0 %v564
    %v758 = vpop.f32.mrf.mxu0
    %v759 = vadd.f32 %v662, %v758
    %v760 = vpop.f32.mrf.mxu0
    %v761 = vadd.f32 %v664, %v760
    %762 = vmatmul.bf16.gmra.mxu0 %v565
    %v763 = vpop.f32.mrf.mxu0
    %v764 = vadd.f32 %v667, %v763
    %v765 = vpop.f32.mrf.mxu0
    %v766 = vadd.f32 %v669, %v765
    %767 = vmatmul.bf16.gmra.mxu0 %v566
    %v768 = vpop.f32.mrf.mxu0
    %v769 = vadd.f32 %v672, %v768
    %v770 = vpop.f32.mrf.mxu0
    %v771 = vadd.f32 %v674, %v770
    %772 = vmatmul.bf16.gmra.mxu0 %v567
    %v773 = vpop.f32.mrf.mxu0
    %v774 = vadd.f32 %v677, %v773
    %v775 = vpop.f32.mrf.mxu0
    %v776 = vadd.f32 %v679, %v775
    %777 = vmatmul.bf16.gmra.mxu0 %v568
    %v778 = vpop.f32.mrf.mxu0
    %v779 = vadd.f32 %v682, %v778
    %v780 = vpop.f32.mrf.mxu0
    %v781 = vadd.f32 %v684, %v780
    %782 = vmatmul.bf16.gmra.mxu0 %v569
    %v783 = vpop.f32.mrf.mxu0
    %v784 = vadd.f32 %v687, %v783
    %v785 = vpop.f32.mrf.mxu0
    %v786 = vadd.f32 %v689, %v785
    %787 = vmatmul.bf16.gmra.mxu0 %v570
    %v788 = vpop.f32.mrf.mxu0
    %v789 = vadd.f32 %v692, %v788
    %v790 = vpop.f32.mrf.mxu0
    %v791 = vadd.f32 %v694, %v790
    %792 = vmatmul.bf16.gmra.mxu0 %v571
    %v793 = vpop.f32.mrf.mxu0
    %v794 = vadd.f32 %v697, %v793
    %v795 = vpop.f32.mrf.mxu0
    %v796 = vadd.f32 %v699, %v795
    %797 = vdwg.mxu0
    %v798 = vld [vmem:[%s5] sm:$0x1]
    %v800 = vperm.slane %v798, 0
    %v802 = vadd.f32 %v759, %v800
    %v803 = vadd.f32 %v761, %v800
    %v804 = vadd.f32 %v764, %v800
    %v805 = vadd.f32 %v766, %v800
    %v806 = vadd.f32 %v769, %v800
    %v807 = vadd.f32 %v771, %v800
    %v808 = vadd.f32 %v774, %v800
    %v809 = vadd.f32 %v776, %v800
    %v810 = vadd.f32 %v779, %v800
    %v811 = vadd.f32 %v781, %v800
    %v812 = vadd.f32 %v784, %v800
    %v813 = vadd.f32 %v786, %v800
    %v814 = vadd.f32 %v789, %v800
    %v815 = vadd.f32 %v791, %v800
    %v816 = vadd.f32 %v794, %v800
    %v817 = vadd.f32 %v796, %v800
    %v818 = vmax.f32 %v802, 0.0
    %v819 = vmax.f32 %v803, 0.0
    %v820 = vmax.f32 %v804, 0.0
    %v821 = vmax.f32 %v805, 0.0
    %v822 = vmax.f32 %v806, 0.0
    %v823 = vmax.f32 %v807, 0.0
    %v824 = vmax.f32 %v808, 0.0
    %v825 = vmax.f32 %v809, 0.0
    %v826 = vmax.f32 %v810, 0.0
    %v827 = vmax.f32 %v811, 0.0
    %v828 = vmax.f32 %v812, 0.0
    %v829 = vmax.f32 %v813, 0.0
    %v830 = vmax.f32 %v814, 0.0
    %v831 = vmax.f32 %v815, 0.0
    %v832 = vmax.f32 %v816, 0.0
    %v833 = vmax.f32 %v817, 0.0
    %v834 = vpack.c.bf16 %v819, %v818
    %v835 = vpack.c.bf16 %v821, %v820
    %v836 = vpack.c.bf16 %v823, %v822
    %v837 = vpack.c.bf16 %v825, %v824
    %v838 = vpack.c.bf16 %v827, %v826
    %v839 = vpack.c.bf16 %v829, %v828
    %v840 = vpack.c.bf16 %v831, %v830
    %v841 = vpack.c.bf16 %v833, %v832
    %s842 = scalar_lea.vmem %s2, 4
    %v843 = vld [vmem:[%s842] sm:$0x7]
    %844 = vmatpush.bf16.msra.mxu0 %v841
    %845 = vmatpush.bf16.msra.mxu0 %v840
    %846 = vmatpush.bf16.msra.mxu0 %v839
    %847 = vmatpush.bf16.msra.mxu0 %v838
    %848 = vmatpush.bf16.msra.mxu0 %v837
    %849 = vmatpush.bf16.msra.mxu0 %v836
    %850 = vmatpush.bf16.msra.mxu0 %v835
    %851 = vmatpush.bf16.msra.mxu0 %v834
    %852 = vmatmul.bf16.gmra.mxu0 %v140
    %v853 = vpop.f32.mrf.mxu0
    %v854 = vadd.f32 0.0, %v853
    %v855 = vpop.f32.mrf.mxu0
    %v856 = vadd.f32 0.0, %v855
    %857 = vmatmul.bf16.gmra.mxu0 %v141
    %v858 = vpop.f32.mrf.mxu0
    %v859 = vadd.f32 0.0, %v858
    %v860 = vpop.f32.mrf.mxu0
    %v861 = vadd.f32 0.0, %v860
    %862 = vmatmul.bf16.gmra.mxu0 %v142
    %v863 = vpop.f32.mrf.mxu0
    %v864 = vadd.f32 0.0, %v863
    %v865 = vpop.f32.mrf.mxu0
    %v866 = vadd.f32 0.0, %v865
    %867 = vmatmul.bf16.gmra.mxu0 %v143
    %v868 = vpop.f32.mrf.mxu0
    %v869 = vadd.f32 0.0, %v868
    %v870 = vpop.f32.mrf.mxu0
    %v871 = vadd.f32 0.0, %v870
    %872 = vmatmul.bf16.gmra.mxu0 %v144
    %v873 = vpop.f32.mrf.mxu0
    %v874 = vadd.f32 0.0, %v873
    %v875 = vpop.f32.mrf.mxu0
    %v876 = vadd.f32 0.0, %v875
    %877 = vmatmul.bf16.gmra.mxu0 %v145
    %v878 = vpop.f32.mrf.mxu0
    %v879 = vadd.f32 0.0, %v878
    %v880 = vpop.f32.mrf.mxu0
    %v881 = vadd.f32 0.0, %v880
    %882 = vmatmul.bf16.gmra.mxu0 %v146
    %v883 = vpop.f32.mrf.mxu0
    %v884 = vadd.f32 0.0, %v883
    %v885 = vpop.f32.mrf.mxu0
    %v886 = vadd.f32 0.0, %v885
    %887 = vmatmul.bf16.gmra.mxu0 %v147
    %v888 = vpop.f32.mrf.mxu0
    %v889 = vadd.f32 0.0, %v888
    %v890 = vpop.f32.mrf.mxu0
    %v891 = vadd.f32 0.0, %v890
    %892 = vdwg.mxu0
    %v893 = vperm.slane %v843, 0
    %v894 = vmul.f32 %v854, %v893
    %v895 = vmul.f32 %v856, %v893
    %v896 = vmul.f32 %v859, %v893
    %v897 = vmul.f32 %v861, %v893
    %v898 = vmul.f32 %v864, %v893
    %v899 = vmul.f32 %v866, %v893
    %v900 = vmul.f32 %v869, %v893
    %v901 = vmul.f32 %v871, %v893
    %v902 = vmul.f32 %v874, %v893
    %v903 = vmul.f32 %v876, %v893
    %v904 = vmul.f32 %v879, %v893
    %v905 = vmul.f32 %v881, %v893
    %v906 = vmul.f32 %v884, %v893
    %v907 = vmul.f32 %v886, %v893
    %v908 = vmul.f32 %v889, %v893
    %v909 = vmul.f32 %v891, %v893
    %910 = vmatpush.bf16.msra.mxu0 %v841
    %911 = vmatpush.bf16.msra.mxu0 %v840
    %912 = vmatpush.bf16.msra.mxu0 %v839
    %913 = vmatpush.bf16.msra.mxu0 %v838
    %914 = vmatpush.bf16.msra.mxu0 %v837
    %915 = vmatpush.bf16.msra.mxu0 %v836
    %916 = vmatpush.bf16.msra.mxu0 %v835
    %917 = vmatpush.bf16.msra.mxu0 %v834
    %918 = vmatmul.bf16.gmra.mxu0 %v319
    %v919 = vpop.f32.mrf.mxu0
    %v920 = vadd.f32 0.0, %v919
    %v921 = vpop.f32.mrf.mxu0
    %v922 = vadd.f32 0.0, %v921
    %923 = vmatmul.bf16.gmra.mxu0 %v320
    %v924 = vpop.f32.mrf.mxu0
    %v925 = vadd.f32 0.0, %v924
    %v926 = vpop.f32.mrf.mxu0
    %v927 = vadd.f32 0.0, %v926
    %928 = vmatmul.bf16.gmra.mxu0 %v321
    %v929 = vpop.f32.mrf.mxu0
    %v930 = vadd.f32 0.0, %v929
    %v931 = vpop.f32.mrf.mxu0
    %v932 = vadd.f32 0.0, %v931
    %933 = vmatmul.bf16.gmra.mxu0 %v322
    %v934 = vpop.f32.mrf.mxu0
    %v935 = vadd.f32 0.0, %v934
    %v936 = vpop.f32.mrf.mxu0
    %v937 = vadd.f32 0.0, %v936
    %938 = vmatmul.bf16.gmra.mxu0 %v323
    %v939 = vpop.f32.mrf.mxu0
    %v940 = vadd.f32 0.0, %v939
    %v941 = vpop.f32.mrf.mxu0
    %v942 = vadd.f32 0.0, %v941
    %943 = vmatmul.bf16.gmra.mxu0 %v324
    %v944 = vpop.f32.mrf.mxu0
    %v945 = vadd.f32 0.0, %v944
    %v946 = vpop.f32.mrf.mxu0
    %v947 = vadd.f32 0.0, %v946
    %948 = vmatmul.bf16.gmra.mxu0 %v325
    %v949 = vpop.f32.mrf.mxu0
    %v950 = vadd.f32 0.0, %v949
    %v951 = vpop.f32.mrf.mxu0
    %v952 = vadd.f32 0.0, %v951
    %953 = vmatmul.bf16.gmra.mxu0 %v326
    %v954 = vpop.f32.mrf.mxu0
    %v955 = vadd.f32 0.0, %v954
    %v956 = vpop.f32.mrf.mxu0
    %v957 = vadd.f32 0.0, %v956
    %958 = vdwg.mxu0
    %v959 = vperm.slane %v843, 1
    %v960 = vmul.f32 %v920, %v959
    %v961 = vmul.f32 %v922, %v959
    %v962 = vmul.f32 %v925, %v959
    %v963 = vmul.f32 %v927, %v959
    %v964 = vmul.f32 %v930, %v959
    %v965 = vmul.f32 %v932, %v959
    %v966 = vmul.f32 %v935, %v959
    %v967 = vmul.f32 %v937, %v959
    %v968 = vmul.f32 %v940, %v959
    %v969 = vmul.f32 %v942, %v959
    %v970 = vmul.f32 %v945, %v959
    %v971 = vmul.f32 %v947, %v959
    %v972 = vmul.f32 %v950, %v959
    %v973 = vmul.f32 %v952, %v959
    %v974 = vmul.f32 %v955, %v959
    %v975 = vmul.f32 %v957, %v959
    %v976 = vadd.f32 %v894, %v960
    %v977 = vadd.f32 %v895, %v961
    %v978 = vadd.f32 %v896, %v962
    %v979 = vadd.f32 %v897, %v963
    %v980 = vadd.f32 %v898, %v964
    %v981 = vadd.f32 %v899, %v965
    %v982 = vadd.f32 %v900, %v966
    %v983 = vadd.f32 %v901, %v967
    %v984 = vadd.f32 %v902, %v968
    %v985 = vadd.f32 %v903, %v969
    %v986 = vadd.f32 %v904, %v970
    %v987 = vadd.f32 %v905, %v971
    %v988 = vadd.f32 %v906, %v972
    %v989 = vadd.f32 %v907, %v973
    %v990 = vadd.f32 %v908, %v974
    %v991 = vadd.f32 %v909, %v975
    %992 = vmatpush.bf16.msra.mxu0 %v841
    %993 = vmatpush.bf16.msra.mxu0 %v840
    %994 = vmatpush.bf16.msra.mxu0 %v839
    %995 = vmatpush.bf16.msra.mxu0 %v838
    %996 = vmatpush.bf16.msra.mxu0 %v837
    %997 = vmatpush.bf16.msra.mxu0 %v836
    %998 = vmatpush.bf16.msra.mxu0 %v835
    %999 = vmatpush.bf16.msra.mxu0 %v834
    %1000 = vmatmul.bf16.gmra.mxu0 %v466
    %v1001 = vpop.f32.mrf.mxu0
    %v1002 = vadd.f32 0.0, %v1001
    %v1003 = vpop.f32.mrf.mxu0
    %v1004 = vadd.f32 0.0, %v1003
    %1005 = vmatmul.bf16.gmra.mxu0 %v467
    %v1006 = vpop.f32.mrf.mxu0
    %v1007 = vadd.f32 0.0, %v1006
    %v1008 = vpop.f32.mrf.mxu0
    %v1009 = vadd.f32 0.0, %v1008
    %1010 = vmatmul.bf16.gmra.mxu0 %v468
    %v1011 = vpop.f32.mrf.mxu0
    %v1012 = vadd.f32 0.0, %v1011
    %v1013 = vpop.f32.mrf.mxu0
    %v1014 = vadd.f32 0.0, %v1013
    %1015 = vmatmul.bf16.gmra.mxu0 %v469
    %v1016 = vpop.f32.mrf.mxu0
    %v1017 = vadd.f32 0.0, %v1016
    %v1018 = vpop.f32.mrf.mxu0
    %v1019 = vadd.f32 0.0, %v1018
    %1020 = vmatmul.bf16.gmra.mxu0 %v470
    %v1021 = vpop.f32.mrf.mxu0
    %v1022 = vadd.f32 0.0, %v1021
    %v1023 = vpop.f32.mrf.mxu0
    %v1024 = vadd.f32 0.0, %v1023
    %1025 = vmatmul.bf16.gmra.mxu0 %v471
    %v1026 = vpop.f32.mrf.mxu0
    %v1027 = vadd.f32 0.0, %v1026
    %v1028 = vpop.f32.mrf.mxu0
    %v1029 = vadd.f32 0.0, %v1028
    %1030 = vmatmul.bf16.gmra.mxu0 %v472
    %v1031 = vpop.f32.mrf.mxu0
    %v1032 = vadd.f32 0.0, %v1031
    %v1033 = vpop.f32.mrf.mxu0
    %v1034 = vadd.f32 0.0, %v1033
    %1035 = vmatmul.bf16.gmra.mxu0 %v473
    %v1036 = vpop.f32.mrf.mxu0
    %v1037 = vadd.f32 0.0, %v1036
    %v1038 = vpop.f32.mrf.mxu0
    %v1039 = vadd.f32 0.0, %v1038
    %1040 = vdwg.mxu0
    %v1041 = vperm.slane %v843, 2
    %v1042 = vmul.f32 %v1002, %v1041
    %v1043 = vmul.f32 %v1004, %v1041
    %v1044 = vmul.f32 %v1007, %v1041
    %v1045 = vmul.f32 %v1009, %v1041
    %v1046 = vmul.f32 %v1012, %v1041
    %v1047 = vmul.f32 %v1014, %v1041
    %v1048 = vmul.f32 %v1017, %v1041
    %v1049 = vmul.f32 %v1019, %v1041
    %v1050 = vmul.f32 %v1022, %v1041
    %v1051 = vmul.f32 %v1024, %v1041
    %v1052 = vmul.f32 %v1027, %v1041
    %v1053 = vmul.f32 %v1029, %v1041
    %v1054 = vmul.f32 %v1032, %v1041
    %v1055 = vmul.f32 %v1034, %v1041
    %v1056 = vmul.f32 %v1037, %v1041
    %v1057 = vmul.f32 %v1039, %v1041
    %v1058 = vadd.f32 %v976, %v1042
    %v1059 = vadd.f32 %v977, %v1043
    %v1060 = vadd.f32 %v978, %v1044
    %v1061 = vadd.f32 %v979, %v1045
    %v1062 = vadd.f32 %v980, %v1046
    %v1063 = vadd.f32 %v981, %v1047
    %v1064 = vadd.f32 %v982, %v1048
    %v1065 = vadd.f32 %v983, %v1049
    %v1066 = vadd.f32 %v984, %v1050
    %v1067 = vadd.f32 %v985, %v1051
    %v1068 = vadd.f32 %v986, %v1052
    %v1069 = vadd.f32 %v987, %v1053
    %v1070 = vadd.f32 %v988, %v1054
    %v1071 = vadd.f32 %v989, %v1055
    %v1072 = vadd.f32 %v990, %v1056
    %v1073 = vadd.f32 %v991, %v1057
    %v1074 = vpack.c.bf16 %v1059, %v1058
    %v1075 = vpack.c.bf16 %v1061, %v1060
    %v1076 = vpack.c.bf16 %v1063, %v1062
    %v1077 = vpack.c.bf16 %v1065, %v1064
    %v1078 = vpack.c.bf16 %v1067, %v1066
    %v1079 = vpack.c.bf16 %v1069, %v1068
    %v1080 = vpack.c.bf16 %v1071, %v1070
    %v1081 = vpack.c.bf16 %v1073, %v1072
    %s1082 = scalar_lea.vmem [#allocation4], 64
    %v1083 = vld [vmem:[%s1082] sm:$0xf]
    %v1084 = vld [vmem:[%s1082 + $0x4] sm:$0xf]
    %v1085 = vld [vmem:[%s1082 + $0x8] sm:$0xf]
    %v1086 = vld [vmem:[%s1082 + $0xc] sm:$0xf]
    %v1087 = vld [vmem:[%s1082 + $0x10] sm:$0xf]
    %v1088 = vld [vmem:[%s1082 + $0x14] sm:$0xf]
    %v1089 = vld [vmem:[%s1082 + $0x18] sm:$0xf]
    %v1090 = vld [vmem:[%s1082 + $0x1c] sm:$0xf]
    %v1091 = vld [vmem:[%s1082 + $0x20] sm:$0xf]
    %v1092 = vld [vmem:[%s1082 + $0x24] sm:$0xf]
    %v1093 = vld [vmem:[%s1082 + $0x28] sm:$0xf]
    %v1094 = vld [vmem:[%s1082 + $0x2c] sm:$0xf]
    %v1095 = vld [vmem:[%s1082 + $0x30] sm:$0xf]
    %v1096 = vld [vmem:[%s1082 + $0x34] sm:$0xf]
    %v1097 = vld [vmem:[%s1082 + $0x38] sm:$0xf]
    %v1098 = vld [vmem:[%s1082 + $0x3c] sm:$0xf]
    %s1099 = scalar_lea.vmem [#allocation6], 64
    %v1100 = vld [vmem:[%s1099] sm:$0xf]
    %v1101 = vld [vmem:[%s1099 + $0x4] sm:$0xf]
    %v1102 = vld [vmem:[%s1099 + $0x8] sm:$0xf]
    %v1103 = vld [vmem:[%s1099 + $0xc] sm:$0xf]
    %v1104 = vld [vmem:[%s1099 + $0x10] sm:$0xf]
    %v1105 = vld [vmem:[%s1099 + $0x14] sm:$0xf]
    %v1106 = vld [vmem:[%s1099 + $0x18] sm:$0xf]
    %v1107 = vld [vmem:[%s1099 + $0x1c] sm:$0xf]
    %v1108 = vld [vmem:[%s1099 + $0x20] sm:$0xf]
    %v1109 = vld [vmem:[%s1099 + $0x24] sm:$0xf]
    %v1110 = vld [vmem:[%s1099 + $0x28] sm:$0xf]
    %v1111 = vld [vmem:[%s1099 + $0x2c] sm:$0xf]
    %v1112 = vld [vmem:[%s1099 + $0x30] sm:$0xf]
    %v1113 = vld [vmem:[%s1099 + $0x34] sm:$0xf]
    %v1114 = vld [vmem:[%s1099 + $0x38] sm:$0xf]
    %v1115 = vld [vmem:[%s1099 + $0x3c] sm:$0xf]
    %v1132 = vunpack.c.l.b16 %v1100
    %v1133 = vunpack.c.l.b16 %v1101
    %v1134 = vunpack.c.l.b16 %v1102
    %v1135 = vunpack.c.l.b16 %v1103
    %v1136 = vunpack.c.l.b16 %v1104
    %v1137 = vunpack.c.l.b16 %v1105
    %v1138 = vunpack.c.l.b16 %v1106
    %v1139 = vunpack.c.l.b16 %v1107
    %v1140 = vunpack.c.l.b16 %v1108
    %v1141 = vunpack.c.l.b16 %v1109
    %v1142 = vunpack.c.l.b16 %v1110
    %v1143 = vunpack.c.l.b16 %v1111
    %v1144 = vunpack.c.l.b16 %v1112
    %v1145 = vunpack.c.l.b16 %v1113
    %v1146 = vunpack.c.l.b16 %v1114
    %v1147 = vunpack.c.l.b16 %v1115
    %v1148 = vpack.c.b16 %v1133, %v1132
    %v1149 = vpack.c.b16 %v1135, %v1134
    %v1150 = vpack.c.b16 %v1137, %v1136
    %v1151 = vpack.c.b16 %v1139, %v1138
    %v1152 = vpack.c.b16 %v1141, %v1140
    %v1153 = vpack.c.b16 %v1143, %v1142
    %v1154 = vpack.c.b16 %v1145, %v1144
    %v1155 = vpack.c.b16 %v1147, %v1146
    %1164 = vmatpush.bf16.msra.mxu0 %v1155
    %1165 = vmatpush.bf16.msra.mxu0 %v1154
    %1166 = vmatpush.bf16.msra.mxu0 %v1153
    %1167 = vmatpush.bf16.msra.mxu0 %v1152
    %1168 = vmatpush.bf16.msra.mxu0 %v1151
    %1169 = vmatpush.bf16.msra.mxu0 %v1150
    %1170 = vmatpush.bf16.msra.mxu0 %v1149
    %1171 = vmatpush.bf16.msra.mxu0 %v1148
    %1172 = vmatmul.bf16.gmra.mxu0 %v834
    %v1173 = vpop.f32.mrf.mxu0
    %v1174 = vadd.f32 0.0, %v1173
    %v1175 = vpop.f32.mrf.mxu0
    %v1176 = vadd.f32 0.0, %v1175
    %1177 = vmatmul.bf16.gmra.mxu0 %v835
    %v1178 = vpop.f32.mrf.mxu0
    %v1179 = vadd.f32 0.0, %v1178
    %v1180 = vpop.f32.mrf.mxu0
    %v1181 = vadd.f32 0.0, %v1180
    %1182 = vmatmul.bf16.gmra.mxu0 %v836
    %v1183 = vpop.f32.mrf.mxu0
    %v1184 = vadd.f32 0.0, %v1183
    %v1185 = vpop.f32.mrf.mxu0
    %v1186 = vadd.f32 0.0, %v1185
    %1187 = vmatmul.bf16.gmra.mxu0 %v837
    %v1188 = vpop.f32.mrf.mxu0
    %v1189 = vadd.f32 0.0, %v1188
    %v1190 = vpop.f32.mrf.mxu0
    %v1191 = vadd.f32 0.0, %v1190
    %1192 = vmatmul.bf16.gmra.mxu0 %v838
    %v1193 = vpop.f32.mrf.mxu0
    %v1194 = vadd.f32 0.0, %v1193
    %v1195 = vpop.f32.mrf.mxu0
    %v1196 = vadd.f32 0.0, %v1195
    %1197 = vmatmul.bf16.gmra.mxu0 %v839
    %v1198 = vpop.f32.mrf.mxu0
    %v1199 = vadd.f32 0.0, %v1198
    %v1200 = vpop.f32.mrf.mxu0
    %v1201 = vadd.f32 0.0, %v1200
    %1202 = vmatmul.bf16.gmra.mxu0 %v840
    %v1203 = vpop.f32.mrf.mxu0
    %v1204 = vadd.f32 0.0, %v1203
    %v1205 = vpop.f32.mrf.mxu0
    %v1206 = vadd.f32 0.0, %v1205
    %1207 = vmatmul.bf16.gmra.mxu0 %v841
    %v1208 = vpop.f32.mrf.mxu0
    %v1209 = vadd.f32 0.0, %v1208
    %v1210 = vpop.f32.mrf.mxu0
    %v1211 = vadd.f32 0.0, %v1210
    %1212 = vdwg.mxu0
    %v1229 = vunpack.c.l.b16 %v1083
    %v1230 = vunpack.c.l.b16 %v1084
    %v1231 = vunpack.c.l.b16 %v1085
    %v1232 = vunpack.c.l.b16 %v1086
    %v1233 = vunpack.c.l.b16 %v1087
    %v1234 = vunpack.c.l.b16 %v1088
    %v1235 = vunpack.c.l.b16 %v1089
    %v1236 = vunpack.c.l.b16 %v1090
    %v1237 = vunpack.c.l.b16 %v1091
    %v1238 = vunpack.c.l.b16 %v1092
    %v1239 = vunpack.c.l.b16 %v1093
    %v1240 = vunpack.c.l.b16 %v1094
    %v1241 = vunpack.c.l.b16 %v1095
    %v1242 = vunpack.c.l.b16 %v1096
    %v1243 = vunpack.c.l.b16 %v1097
    %v1244 = vunpack.c.l.b16 %v1098
    %v1245 = vpack.c.b16 %v1230, %v1229
    %v1246 = vpack.c.b16 %v1232, %v1231
    %v1247 = vpack.c.b16 %v1234, %v1233
    %v1248 = vpack.c.b16 %v1236, %v1235
    %v1249 = vpack.c.b16 %v1238, %v1237
    %v1250 = vpack.c.b16 %v1240, %v1239
    %v1251 = vpack.c.b16 %v1242, %v1241
    %v1252 = vpack.c.b16 %v1244, %v1243
    %1261 = vmatpush.bf16.msra.mxu0 %v1252
    %1262 = vmatpush.bf16.msra.mxu0 %v1251
    %1263 = vmatpush.bf16.msra.mxu0 %v1250
    %1264 = vmatpush.bf16.msra.mxu0 %v1249
    %1265 = vmatpush.bf16.msra.mxu0 %v1248
    %1266 = vmatpush.bf16.msra.mxu0 %v1247
    %1267 = vmatpush.bf16.msra.mxu0 %v1246
    %1268 = vmatpush.bf16.msra.mxu0 %v1245
    %1269 = vmatmul.bf16.gmra.mxu0 %v1074
    %v1270 = vpop.f32.mrf.mxu0
    %v1271 = vadd.f32 %v1174, %v1270
    %v1272 = vpop.f32.mrf.mxu0
    %v1273 = vadd.f32 %v1176, %v1272
    %1274 = vmatmul.bf16.gmra.mxu0 %v1075
    %v1275 = vpop.f32.mrf.mxu0
    %v1276 = vadd.f32 %v1179, %v1275
    %v1277 = vpop.f32.mrf.mxu0
    %v1278 = vadd.f32 %v1181, %v1277
    %1279 = vmatmul.bf16.gmra.mxu0 %v1076
    %v1280 = vpop.f32.mrf.mxu0
    %v1281 = vadd.f32 %v1184, %v1280
    %v1282 = vpop.f32.mrf.mxu0
    %v1283 = vadd.f32 %v1186, %v1282
    %1284 = vmatmul.bf16.gmra.mxu0 %v1077
    %v1285 = vpop.f32.mrf.mxu0
    %v1286 = vadd.f32 %v1189, %v1285
    %v1287 = vpop.f32.mrf.mxu0
    %v1288 = vadd.f32 %v1191, %v1287
    %1289 = vmatmul.bf16.gmra.mxu0 %v1078
    %v1290 = vpop.f32.mrf.mxu0
    %v1291 = vadd.f32 %v1194, %v1290
    %v1292 = vpop.f32.mrf.mxu0
    %v1293 = vadd.f32 %v1196, %v1292
    %1294 = vmatmul.bf16.gmra.mxu0 %v1079
    %v1295 = vpop.f32.mrf.mxu0
    %v1296 = vadd.f32 %v1199, %v1295
    %v1297 = vpop.f32.mrf.mxu0
    %v1298 = vadd.f32 %v1201, %v1297
    %1299 = vmatmul.bf16.gmra.mxu0 %v1080
    %v1300 = vpop.f32.mrf.mxu0
    %v1301 = vadd.f32 %v1204, %v1300
    %v1302 = vpop.f32.mrf.mxu0
    %v1303 = vadd.f32 %v1206, %v1302
    %1304 = vmatmul.bf16.gmra.mxu0 %v1081
    %v1305 = vpop.f32.mrf.mxu0
    %v1306 = vadd.f32 %v1209, %v1305
    %v1307 = vpop.f32.mrf.mxu0
    %v1308 = vadd.f32 %v1211, %v1307
    %1309 = vdwg.mxu0
    %s1310 = scalar_lea.vmem %s5, 1
    %v1311 = vld [vmem:[%s1310] sm:$0x1]
    %v1313 = vperm.slane %v1311, 0
    %v1315 = vadd.f32 %v1271, %v1313
    %v1316 = vadd.f32 %v1273, %v1313
    %v1317 = vadd.f32 %v1276, %v1313
    %v1318 = vadd.f32 %v1278, %v1313
    %v1319 = vadd.f32 %v1281, %v1313
    %v1320 = vadd.f32 %v1283, %v1313
    %v1321 = vadd.f32 %v1286, %v1313
    %v1322 = vadd.f32 %v1288, %v1313
    %v1323 = vadd.f32 %v1291, %v1313
    %v1324 = vadd.f32 %v1293, %v1313
    %v1325 = vadd.f32 %v1296, %v1313
    %v1326 = vadd.f32 %v1298, %v1313
    %v1327 = vadd.f32 %v1301, %v1313
    %v1328 = vadd.f32 %v1303, %v1313
    %v1329 = vadd.f32 %v1306, %v1313
    %v1330 = vadd.f32 %v1308, %v1313
    %v1331 = vmax.f32 %v1315, 0.0
    %v1332 = vmax.f32 %v1316, 0.0
    %v1333 = vmax.f32 %v1317, 0.0
    %v1334 = vmax.f32 %v1318, 0.0
    %v1335 = vmax.f32 %v1319, 0.0
    %v1336 = vmax.f32 %v1320, 0.0
    %v1337 = vmax.f32 %v1321, 0.0
    %v1338 = vmax.f32 %v1322, 0.0
    %v1339 = vmax.f32 %v1323, 0.0
    %v1340 = vmax.f32 %v1324, 0.0
    %v1341 = vmax.f32 %v1325, 0.0
    %v1342 = vmax.f32 %v1326, 0.0
    %v1343 = vmax.f32 %v1327, 0.0
    %v1344 = vmax.f32 %v1328, 0.0
    %v1345 = vmax.f32 %v1329, 0.0
    %v1346 = vmax.f32 %v1330, 0.0
    %v1347 = vpack.c.bf16 %v1332, %v1331
    %v1348 = vpack.c.bf16 %v1334, %v1333
    %v1349 = vpack.c.bf16 %v1336, %v1335
    %v1350 = vpack.c.bf16 %v1338, %v1337
    %v1351 = vpack.c.bf16 %v1340, %v1339
    %v1352 = vpack.c.bf16 %v1342, %v1341
    %v1353 = vpack.c.bf16 %v1344, %v1343
    %v1354 = vpack.c.bf16 %v1346, %v1345
    %1355 = vst [vmem:[%s7] sm:$0xff] %v1331
    %1356 = vst [vmem:[%s7 + $0x8] sm:$0xff] %v1332
    %1357 = vst [vmem:[%s7 + $0x10] sm:$0xff] %v1333
    %1358 = vst [vmem:[%s7 + $0x18] sm:$0xff] %v1334
    %1359 = vst [vmem:[%s7 + $0x20] sm:$0xff] %v1335
    %1360 = vst [vmem:[%s7 + $0x28] sm:$0xff] %v1336
    %1361 = vst [vmem:[%s7 + $0x30] sm:$0xff] %v1337
    %1362 = vst [vmem:[%s7 + $0x38] sm:$0xff] %v1338
    %1363 = vst [vmem:[%s7 + $0x40] sm:$0xff] %v1339
    %1364 = vst [vmem:[%s7 + $0x48] sm:$0xff] %v1340
    %1365 = vst [vmem:[%s7 + $0x50] sm:$0xff] %v1341
    %1366 = vst [vmem:[%s7 + $0x58] sm:$0xff] %v1342
    %1367 = vst [vmem:[%s7 + $0x60] sm:$0xff] %v1343
    %1368 = vst [vmem:[%s7 + $0x68] sm:$0xff] %v1344
    %1369 = vst [vmem:[%s7 + $0x70] sm:$0xff] %v1345
    %1370 = vst [vmem:[%s7 + $0x78] sm:$0xff] %v1346
    %v1371 = vld [vmem:[%s6] sm:$0xf]
    %1372 = vmatpush.bf16.msra.mxu0 %v1354
    %1373 = vmatpush.bf16.msra.mxu0 %v1353
    %1374 = vmatpush.bf16.msra.mxu0 %v1352
    %1375 = vmatpush.bf16.msra.mxu0 %v1351
    %1376 = vmatpush.bf16.msra.mxu0 %v1350
    %1377 = vmatpush.bf16.msra.mxu0 %v1349
    %1378 = vmatpush.bf16.msra.mxu0 %v1348
    %1379 = vmatpush.bf16.msra.mxu0 %v1347
    %1380 = vmatmul.bf16.gmra.mxu0 %v1371
    %v1381 = vpop.f32.mrf.mxu0
    %v1382 = vadd.f32 0.0, %v1381
    %v1383 = vpop.f32.mrf.mxu0
    %1384 = vdwg.mxu0
    %1385 = vst [vmem:[%s8] sm:$0xff] %v1382
    // Predicated region
    $region42: #{glycan_compgcn_forward.1} parent=1 // pred_check
      _
    $region43: #{glycan_compgcn_forward.1} parent=1 // pred_check_branch
      %1387 = sbr.rel (0) target = $region45
    $region44: #{glycan_compgcn_forward.1} parent=1 // pred_region
      _
    $region45: #{glycan_compgcn_forward.1} parent=1 // pred_fallthru
      _
    // Predicated region
    $region46: #{glycan_compgcn_forward.1} parent=1 // pred_check
      _
    $region47: #{glycan_compgcn_forward.1} parent=1 // pred_check_branch
      %1389 = sbr.rel (0) target = $region49
    $region48: #{glycan_compgcn_forward.1} parent=1 // pred_region
      _
    $region49: #{glycan_compgcn_forward.1} parent=1 // pred_fallthru
      _
    // Predicated region
    $region50: #{glycan_compgcn_forward.1} parent=1 // pred_check
      _
    $region51: #{glycan_compgcn_forward.1} parent=1 // pred_check_branch
      %1391 = sbr.rel (0) target = $region53
    $region52: #{glycan_compgcn_forward.1} parent=1 // pred_region
      _
    $region53: #{glycan_compgcn_forward.1} parent=1 // pred_fallthru
      _
    // Predicated region
    $region54: #{glycan_compgcn_forward.1} parent=1 // pred_check
      _
    $region55: #{glycan_compgcn_forward.1} parent=1 // pred_check_branch
      %1393 = sbr.rel (0) target = $region57
    $region56: #{glycan_compgcn_forward.1} parent=1 // pred_region
      _
    $region57: #{glycan_compgcn_forward.1} parent=1 // pred_fallthru
      _
    %1394 = vsyncpa [#allocation3], 1
    %1395 = vsyncpa [#allocation5], 1

</llo_original>
